<compile_context>
chip_gen: v6e
topology: v6e:2x2x1
jax: 0.10.0
libtpu: 0.0.40
codegen_flags: <defaults>
</compile_context>

<pallas_src>
import numpy as np

import jax
import jax.numpy as jnp
from jax.experimental import pallas as pl
from jax.experimental.pallas import tpu as pltpu

VMEM_SPEC = pl.BlockSpec(memory_space=pltpu.MemorySpace.VMEM)


def _round_up(v, m):
    return (v + m - 1) // m * m


# ----------------------------------------------------------------------------
# Init-time folding of conv / convT / GDN layers into dense linear maps.
# Flat layout per sample: feature index = channel * length + position.
# ----------------------------------------------------------------------------
def _conv1d_dense(w, b, stride, padding, lin):
    """PyTorch Conv1d as  y_flat = x_flat @ A + b_row.  w:(Cout,Cin,K)."""
    w = np.asarray(w, np.float32)
    b = np.asarray(b, np.float32)
    cout, cin, k = w.shape
    lout = (lin + 2 * padding - k) // stride + 1
    A = np.zeros((cin, lin, cout, lout), np.float32)
    for j in range(lout):
        for t in range(k):
            l = j * stride + t - padding
            if 0 <= l < lin:
                A[:, l, :, j] += w[:, :, t].T          # (cin, cout)
    b_row = np.repeat(b, lout)[None, :].astype(np.float32)
    return A.reshape(cin * lin, cout * lout), b_row, lout


def _convT1d_dense(w, b, stride, lin):
    """PyTorch ConvTranspose1d (padding=0) as a dense map.  w:(Cin,Cout,K)."""
    w = np.asarray(w, np.float32)
    b = np.asarray(b, np.float32)
    cin, cout, k = w.shape
    lout = (lin - 1) * stride + k
    A = np.zeros((cin, lin, cout, lout), np.float32)
    for i in range(lin):
        for t in range(k):
            A[:, i, :, i * stride + t] += w[:, :, t]   # (cin, cout)
    b_row = np.repeat(b, lout)[None, :].astype(np.float32)
    return A.reshape(cin * lin, cout * lout), b_row, lout


def _gdn_dense(gamma, beta, l):
    """GDN channel mixing on the flat layout:
    denom_flat = (x*x)_flat @ G + beta_row ; y = x * rsqrt(denom)."""
    gamma = np.asarray(gamma, np.float32)
    beta = np.asarray(beta, np.float32)
    c = gamma.shape[0]
    G = np.zeros((c, l, c, l), np.float32)
    for j in range(l):
        G[:, j, :, j] = gamma.T                        # G[k,j,c,j] = gamma[c,k]
    beta_row = np.repeat(beta, l)[None, :].astype(np.float32)
    return G.reshape(c * l, c * l), beta_row


# ----------------------------------------------------------------------------
# Synthetic raw parameters (same construction as the reference nn.Module would
# hold: PyTorch-layout conv weights + GDN gamma/beta).
# ----------------------------------------------------------------------------
def _conv_p(key, cout, cin, k):
    kw, kb = jax.random.split(key)
    std = 1.0 / jnp.sqrt(float(cin * k))
    w = jax.random.normal(kw, (cout, cin, k), jnp.float32) * std
    b = jax.random.normal(kb, (cout,), jnp.float32) * 0.05
    return w, b


def _convT_p(key, cin, cout, k):
    kw, kb = jax.random.split(key)
    std = 1.0 / jnp.sqrt(float(cin * k))
    w = jax.random.normal(kw, (cin, cout, k), jnp.float32) * std
    b = jax.random.normal(kb, (cout,), jnp.float32) * 0.05
    return w, b


def init_params(cstd, key):
    keys = iter(jax.random.split(key, 64))
    p = {}
    c = cstd
    p["conv1_w"], p["conv1_b"] = _conv_p(next(keys), c, 1, 3)
    p["gdn2_gamma"] = 0.1 * jnp.eye(c, dtype=jnp.float32) + 0.01
    p["gdn2_beta"] = jnp.ones((c,), jnp.float32)
    p["conv3_w"], p["conv3_b"] = _conv_p(next(keys), c, c, 2)
    p["gdn4_gamma"] = 0.1 * jnp.eye(c, dtype=jnp.float32) + 0.01
    p["gdn4_beta"] = jnp.ones((c,), jnp.float32)
    for i, k in enumerate([3, 3, 3]):       # rnab5: downsample1 / upsample1
        p[f"d1_{i}_w"], p[f"d1_{i}_b"] = _conv_p(next(keys), c, c, k)
        p[f"u1_{i}_w"], p[f"u1_{i}_b"] = _convT_p(next(keys), c, c, k)
    p["conv6_w"], p["conv6_b"] = _conv_p(next(keys), c, c, 3)
    p["gdn7_gamma"] = 0.1 * jnp.eye(c, dtype=jnp.float32) + 0.01
    p["gdn7_beta"] = jnp.ones((c,), jnp.float32)
    p["conv8_w"], p["conv8_b"] = _conv_p(next(keys), c, c, 3)
    for i, k in enumerate([2, 3, 2]):       # rnab9: downsample2 / upsample2
        p[f"d2_{i}_w"], p[f"d2_{i}_b"] = _conv_p(next(keys), c, c, k)
        p[f"u2_{i}_w"], p[f"u2_{i}_b"] = _convT_p(next(keys), c, c, k)
    p["convA_w"], p["convA_b"] = _conv_p(next(keys), c, c, 3)
    p["convB_w"], p["convB_b"] = _conv_p(next(keys), c, c, 3)
    p["convC_w"], p["convC_b"] = _conv_p(next(keys), c, c, 3)
    p["conv10_w"], p["conv10_b"] = _conv_p(next(keys), c, 4 * c, 2)
    return p


# ----------------------------------------------------------------------------
# Fold every layer into dense (A, bias_row) numpy matrices, once, at init.
# ----------------------------------------------------------------------------
def build_folded(p, cstd, dim):
    A, B = {}, {}

    def conv(name, stride, padding, lin):
        a, b, lout = _conv1d_dense(p[name + "_w"], p[name + "_b"], stride, padding, lin)
        A[name], B[name] = a, b
        return lout

    def convT(name, stride, lin):
        a, b, lout = _convT1d_dense(p[name + "_w"], p[name + "_b"], stride, lin)
        A[name], B[name] = a, b
        return lout

    def gdn(name, l):
        G, beta = _gdn_dense(p[name + "_gamma"], p[name + "_beta"], l)
        A[name + "_G"], B[name + "_beta"] = G, beta

    L0 = dim
    L1 = conv("conv1", 2, 1, L0)                         # k3 s2 p1
    gdn("gdn2", L1)
    L3 = conv("conv3", 2, 0, L1)                         # k2 s2
    gdn("gdn4", L3)
    l = L3                                               # rnab5
    for i in range(3):
        l = conv(f"d1_{i}", 2, 0, l)                     # k3 s2 x3
    for i in range(3):
        l = convT(f"u1_{i}", 2, l)                       # convT k3 s2 x3
    assert l == L3
    L6 = conv("conv6", 2, 0, L3)                         # k3 s2
    gdn("gdn7", L6)
    L8 = conv("conv8", 2, 1, L6)                         # k3 s2 p1
    strides2 = (1, 2, 1)                                 # rnab9
    l = L8
    for i in range(3):
        l = conv(f"d2_{i}", strides2[i], 0, l)           # k2 s1, k3 s2, k2 s1
    for i in range(3):
        l = convT(f"u2_{i}", strides2[i], l)
    assert l == L8
    la = conv("convA", 8, 0, L1)                         # k3 s8
    lb = conv("convB", 4, 0, L3)                         # k3 s4
    lc = conv("convC", 2, 1, L6)                         # k3 s2 p1
    assert la == lb == lc == L8

    # Pre-multiply back-to-back linear pairs (no activation between them):
    #   d1_2 ∘ u1_0  ->  d1_f   ;   d2_2 ∘ u2_0  ->  d2_f
    def fuse(first, second, out_name):
        A1, b1 = A.pop(first), B.pop(first)
        A2, b2 = A.pop(second), B.pop(second)
        A[out_name] = A1 @ A2
        B[out_name] = b1 @ A2 + b2

    fuse("d1_2", "u1_0", "d1_f")
    fuse("d2_2", "u2_0", "d2_f")

    # conv10 acts on the channel-concat [h, ha, hb, hc]; split its dense matrix
    # into one row block per branch so no in-kernel concatenate is needed.
    A10, b10, L10 = _conv1d_dense(p["conv10_w"], p["conv10_b"], 2, 0, L8)
    blk = cstd * L8
    for bi, tag in enumerate(("h", "a", "b", "c")):
        A["conv10_" + tag] = A10[bi * blk:(bi + 1) * blk]
    B["conv10"] = b10
    return A, B, dict(L0=L0, L1=L1, L3=L3, L6=L6, L8=L8, L10=L10)


# ----------------------------------------------------------------------------
# Pack all folded matrices into ONE bf16 slab and all bias rows into ONE f32
# slab.  Matrices are indexed inside the kernel with static row/col slices
# (row offsets 16-aligned for the bf16 (16,128) tile layout).
# ----------------------------------------------------------------------------
def pack_slabs(A, B):
    lane_pad = _round_up(max(a.shape[1] for a in A.values()), 128)

    widx, rows = {}, 0
    for nm, a in A.items():
        r, c = a.shape
        widx[nm] = (rows, r, c)
        rows += _round_up(r, 16)
    Wnp = np.zeros((_round_up(rows, 16), lane_pad), np.float32)
    for nm, a in A.items():
        off, r, c = widx[nm]
        Wnp[off:off + r, :c] = a

    bidx = {}
    bnames = list(B.keys())
    Bnp = np.zeros((_round_up(len(bnames), 8), lane_pad), np.float32)
    for i, nm in enumerate(bnames):
        b = B[nm]
        bidx[nm] = (i, b.shape[1])
        Bnp[i, :b.shape[1]] = b[0]

    return (jnp.asarray(Wnp, jnp.bfloat16), widx,
            jnp.asarray(Bnp, jnp.float32), bidx)


# ----------------------------------------------------------------------------
# Single fused Pallas kernel for the whole forward pass.
# ----------------------------------------------------------------------------
def make_tucodec_encode(raw_params, cstd, dim, n, sigmoid=False):
    A, B, L = build_folded(raw_params, cstd, dim)
    out_flat = cstd * L["L10"]
    OUT_PAD = _round_up(out_flat, 128)          # lane-dense output store

    # Zero-pad conv10 columns / bias to the padded lane width at init time.
    for tag in ("h", "a", "b", "c"):
        m = A["conv10_" + tag]
        A["conv10_" + tag] = np.pad(m, ((0, 0), (0, OUT_PAD - m.shape[1])))
    B["conv10"] = np.pad(B["conv10"], ((0, 0), (0, OUT_PAD - B["conv10"].shape[1])))

    Wslab, widx, Bslab, bidx = pack_slabs(A, B)

    def kernel(x_ref, w_ref, b_ref, o_ref):
        def mat(nm):                                    # bf16 weight block
            off, r, c = widx[nm]
            return w_ref[off:off + r, 0:c]

        def bias(nm):                                   # f32 bias row (1, c)
            i, c = bidx[nm]
            return b_ref[i:i + 1, 0:c]

        def dot(a, m):                                  # bf16 MXU, f32 acc
            return jnp.dot(a.astype(jnp.bfloat16), m,
                           preferred_element_type=jnp.float32)

        def lin(h, nm, relu=False):
            y = dot(h, mat(nm)) + bias(nm)
            return jnp.maximum(y, 0.0) if relu else y

        def gdn(h, nm):
            d = dot(h * h, mat(nm + "_G")) + bias(nm + "_beta")
            d = jnp.maximum(d, 1e-6)                    # guard rsqrt domain
            return h * jax.lax.rsqrt(d)

        def rab_combine(x_in, att):
            a = jax.nn.sigmoid(att) if sigmoid else att
            return x_in * (1.0 + a)                     # == x + x * att

        x = x_ref[...]                                  # (N, 1*L0) f32
        h = lin(x, "conv1")
        h = gdn(h, "gdn2")
        xa = h                                          # (N, C*L1)
        h = lin(h, "conv3")
        h = gdn(h, "gdn4")
        xb = h                                          # (N, C*L3)
        # rnab5 (residual attention, downsample1/upsample1)
        t = lin(xb, "d1_0", True)
        t = lin(t, "d1_1", True)
        t = lin(t, "d1_f", True)                        # fused d1_2 ∘ u1_0
        t = lin(t, "u1_1", True)
        t = lin(t, "u1_2")
        h = rab_combine(xb, t)
        h = lin(h, "conv6")
        h = gdn(h, "gdn7")
        xc = h                                          # (N, C*L6)
        h = lin(h, "conv8")
        # rnab9 (residual attention, downsample2/upsample2)
        r = h
        t = lin(r, "d2_0", True)
        t = lin(t, "d2_1", True)
        t = lin(t, "d2_f", True)                        # fused d2_2 ∘ u2_0
        t = lin(t, "u2_1", True)
        t = lin(t, "u2_2")
        h = rab_combine(r, t)                           # (N, C*L8)
        # multi-scale heads; torch.cat + conv10 folded into four row blocks
        ha = lin(xa, "convA")
        hb = lin(xb, "convB")
        hc = lin(xc, "convC")
        out = (dot(h, mat("conv10_h")) + dot(ha, mat("conv10_a"))
               + dot(hb, mat("conv10_b")) + dot(hc, mat("conv10_c"))
               + bias("conv10"))
        o_ref[...] = out                                # unmasked (N, 128) store

    # Advisory cost estimate (dense-folded FLOPs; scheduler hint only).
    flops = 2 * n * sum(r * c for (_, r, c) in widx.values())
    transcendentals = n * cstd * (L["L1"] + L["L3"] + L["L6"])
    bytes_accessed = int(Wslab.size) * 2 + int(Bslab.size) * 4 + n * (dim + OUT_PAD) * 4

    fused = pl.pallas_call(
        kernel,
        out_shape=jax.ShapeDtypeStruct((n, OUT_PAD), jnp.float32),
        in_specs=[VMEM_SPEC, VMEM_SPEC, VMEM_SPEC],
        out_specs=VMEM_SPEC,
        cost_estimate=pl.CostEstimate(flops=int(flops),
                                      transcendentals=int(transcendentals),
                                      bytes_accessed=int(bytes_accessed)),
    )

    shapes = ((n, 1, dim), (n, cstd, L["L1"]), (n, cstd, L["L3"]),
              (n, cstd, L["L6"]), (n, 4 * cstd, L["L8"]))

    @jax.jit
    def forward(x):
        # x: (N, 1, DIM) -> flat (N, DIM) (Cin=1, so this is a free reshape).
        out = fused(x.reshape(n, dim), Wslab, Bslab)
        return out[:, :out_flat].reshape(n, cstd, L["L10"])

    return forward, shapes


if __name__ == "__main__":
    # DIM chosen so every stride/kernel combo is shape-consistent; N=8 fills
    # all f32 sublanes per MXU pass.
    N, Cstd, DIM = 8, 4, 94
    params = init_params(Cstd, jax.random.PRNGKey(42))
    x = jax.random.normal(jax.random.PRNGKey(0), (N, 1, DIM), jnp.float32)

    forward, shapes = make_tucodec_encode(params, Cstd, DIM, N, sigmoid=False)
    h = jax.block_until_ready(forward(x))

    x1, x3, x6, x8, x10 = shapes
    assert x1 == (N, 1, DIM)
    assert x3 == (N, Cstd, 47)
    assert x6 == (N, Cstd, 23)
    assert x8 == (N, Cstd, 11)
    assert x10 == (N, 4 * Cstd, 6)
    assert h.shape == (N, Cstd, 3)
    assert bool(jnp.all(jnp.isfinite(h)))
    print("KERNEL_OK")
</pallas_src>

<mosaic_0001>
module attributes {stable_mosaic.version = 11 : i64} {
  func.func @kernel(%arg0: memref<8x94xf32, #tpu.memory_space<vmem>>, %arg1: memref<1616x256xbf16, #tpu.memory_space<vmem>>, %arg2: memref<24x256xf32, #tpu.memory_space<vmem>>, %arg3: memref<8x128xf32, #tpu.memory_space<vmem>>) attributes {dimension_semantics = [], scalar_prefetch = 0 : i64, scratch_operands = 0 : i64, tpu.core_type = #tpu.core_type<tc>} {
    %c0 = arith.constant 0 : index
    %c0_0 = arith.constant 0 : index
    %0 = vector.load %arg0[%c0, %c0_0] : memref<8x94xf32, #tpu.memory_space<vmem>>, vector<8x94xf32>
    %c0_1 = arith.constant 0 : index
    %c0_2 = arith.constant 0 : index
    %1 = vector.load %arg1[%c0_1, %c0_2] : memref<1616x256xbf16, #tpu.memory_space<vmem>>, vector<94x188xbf16>
    %2 = arith.truncf %0 : vector<8x94xf32> to vector<8x94xbf16>
    %cst = arith.constant dense<0.000000e+00> : vector<8x188xf32>
    %3 = tpu.matmul %2, %1, %cst {dimension_numbers = #tpu.dot_dimension_numbers<[1], [0], [0], [1], [0, 0, 1, 1], [], []>} : vector<8x94xbf16>, vector<94x188xbf16>, vector<8x188xf32> -> vector<8x188xf32>
    %c0_3 = arith.constant 0 : index
    %c0_4 = arith.constant 0 : index
    %4 = vector.load %arg2[%c0_3, %c0_4] : memref<24x256xf32, #tpu.memory_space<vmem>>, vector<1x188xf32>
    %5 = vector.broadcast %4 : vector<1x188xf32> to vector<8x188xf32>
    %6 = arith.addf %3, %5 : vector<8x188xf32>
    %7 = arith.mulf %6, %6 : vector<8x188xf32>
    %c96 = arith.constant 96 : index
    %c0_5 = arith.constant 0 : index
    %8 = vector.load %arg1[%c96, %c0_5] : memref<1616x256xbf16, #tpu.memory_space<vmem>>, vector<188x188xbf16>
    %9 = arith.truncf %7 : vector<8x188xf32> to vector<8x188xbf16>
    %cst_6 = arith.constant dense<0.000000e+00> : vector<8x188xf32>
    %10 = tpu.matmul %9, %8, %cst_6 {dimension_numbers = #tpu.dot_dimension_numbers<[1], [0], [0], [1], [0, 0, 1, 1], [], []>} : vector<8x188xbf16>, vector<188x188xbf16>, vector<8x188xf32> -> vector<8x188xf32>
    %c1 = arith.constant 1 : index
    %c0_7 = arith.constant 0 : index
    %11 = vector.load %arg2[%c1, %c0_7] : memref<24x256xf32, #tpu.memory_space<vmem>>, vector<1x188xf32>
    %12 = vector.broadcast %11 : vector<1x188xf32> to vector<8x188xf32>
    %13 = arith.addf %10, %12 : vector<8x188xf32>
    %cst_8 = arith.constant 9.99999997E-7 : f32
    %14 = vector.broadcast %cst_8 : f32 to vector<8x188xf32>
    %15 = arith.maximumf %13, %14 : vector<8x188xf32>
    %16 = math.rsqrt %15 : vector<8x188xf32>
    %17 = arith.mulf %6, %16 : vector<8x188xf32>
    %c288 = arith.constant 288 : index
    %c0_9 = arith.constant 0 : index
    %18 = vector.load %arg1[%c288, %c0_9] : memref<1616x256xbf16, #tpu.memory_space<vmem>>, vector<188x92xbf16>
    %19 = arith.truncf %17 : vector<8x188xf32> to vector<8x188xbf16>
    %cst_10 = arith.constant dense<0.000000e+00> : vector<8x92xf32>
    %20 = tpu.matmul %19, %18, %cst_10 {dimension_numbers = #tpu.dot_dimension_numbers<[1], [0], [0], [1], [0, 0, 1, 1], [], []>} : vector<8x188xbf16>, vector<188x92xbf16>, vector<8x92xf32> -> vector<8x92xf32>
    %c2 = arith.constant 2 : index
    %c0_11 = arith.constant 0 : index
    %21 = vector.load %arg2[%c2, %c0_11] : memref<24x256xf32, #tpu.memory_space<vmem>>, vector<1x92xf32>
    %22 = vector.broadcast %21 : vector<1x92xf32> to vector<8x92xf32>
    %23 = arith.addf %20, %22 : vector<8x92xf32>
    %24 = arith.mulf %23, %23 : vector<8x92xf32>
    %c480 = arith.constant 480 : index
    %c0_12 = arith.constant 0 : index
    %25 = vector.load %arg1[%c480, %c0_12] : memref<1616x256xbf16, #tpu.memory_space<vmem>>, vector<92x92xbf16>
    %26 = arith.truncf %24 : vector<8x92xf32> to vector<8x92xbf16>
    %cst_13 = arith.constant dense<0.000000e+00> : vector<8x92xf32>
    %27 = tpu.matmul %26, %25, %cst_13 {dimension_numbers = #tpu.dot_dimension_numbers<[1], [0], [0], [1], [0, 0, 1, 1], [], []>} : vector<8x92xbf16>, vector<92x92xbf16>, vector<8x92xf32> -> vector<8x92xf32>
    %c3 = arith.constant 3 : index
    %c0_14 = arith.constant 0 : index
    %28 = vector.load %arg2[%c3, %c0_14] : memref<24x256xf32, #tpu.memory_space<vmem>>, vector<1x92xf32>
    %29 = vector.broadcast %28 : vector<1x92xf32> to vector<8x92xf32>
    %30 = arith.addf %27, %29 : vector<8x92xf32>
    %cst_15 = arith.constant 9.99999997E-7 : f32
    %31 = vector.broadcast %cst_15 : f32 to vector<8x92xf32>
    %32 = arith.maximumf %30, %31 : vector<8x92xf32>
    %33 = math.rsqrt %32 : vector<8x92xf32>
    %34 = arith.mulf %23, %33 : vector<8x92xf32>
    %c576 = arith.constant 576 : index
    %c0_16 = arith.constant 0 : index
    %35 = vector.load %arg1[%c576, %c0_16] : memref<1616x256xbf16, #tpu.memory_space<vmem>>, vector<92x44xbf16>
    %36 = arith.truncf %34 : vector<8x92xf32> to vector<8x92xbf16>
    %cst_17 = arith.constant dense<0.000000e+00> : vector<8x44xf32>
    %37 = tpu.matmul %36, %35, %cst_17 {dimension_numbers = #tpu.dot_dimension_numbers<[1], [0], [0], [1], [0, 0, 1, 1], [], []>} : vector<8x92xbf16>, vector<92x44xbf16>, vector<8x44xf32> -> vector<8x44xf32>
    %c4 = arith.constant 4 : index
    %c0_18 = arith.constant 0 : index
    %38 = vector.load %arg2[%c4, %c0_18] : memref<24x256xf32, #tpu.memory_space<vmem>>, vector<1x44xf32>
    %39 = vector.broadcast %38 : vector<1x44xf32> to vector<8x44xf32>
    %40 = arith.addf %37, %39 : vector<8x44xf32>
    %cst_19 = arith.constant 0.000000e+00 : f32
    %41 = vector.broadcast %cst_19 : f32 to vector<8x44xf32>
    %42 = arith.maximumf %40, %41 : vector<8x44xf32>
    %c672 = arith.constant 672 : index
    %c0_20 = arith.constant 0 : index
    %43 = vector.load %arg1[%c672, %c0_20] : memref<1616x256xbf16, #tpu.memory_space<vmem>>, vector<44x20xbf16>
    %44 = arith.truncf %42 : vector<8x44xf32> to vector<8x44xbf16>
    %cst_21 = arith.constant dense<0.000000e+00> : vector<8x20xf32>
    %45 = tpu.matmul %44, %43, %cst_21 {dimension_numbers = #tpu.dot_dimension_numbers<[1], [0], [0], [1], [0, 0, 1, 1], [], []>} : vector<8x44xbf16>, vector<44x20xbf16>, vector<8x20xf32> -> vector<8x20xf32>
    %c5 = arith.constant 5 : index
    %c0_22 = arith.constant 0 : index
    %46 = vector.load %arg2[%c5, %c0_22] : memref<24x256xf32, #tpu.memory_space<vmem>>, vector<1x20xf32>
    %47 = vector.broadcast %46 : vector<1x20xf32> to vector<8x20xf32>
    %48 = arith.addf %45, %47 : vector<8x20xf32>
    %cst_23 = arith.constant 0.000000e+00 : f32
    %49 = vector.broadcast %cst_23 : f32 to vector<8x20xf32>
    %50 = arith.maximumf %48, %49 : vector<8x20xf32>
    %c1440 = arith.constant 1440 : index
    %c0_24 = arith.constant 0 : index
    %51 = vector.load %arg1[%c1440, %c0_24] : memref<1616x256xbf16, #tpu.memory_space<vmem>>, vector<20x20xbf16>
    %52 = arith.truncf %50 : vector<8x20xf32> to vector<8x20xbf16>
    %cst_25 = arith.constant dense<0.000000e+00> : vector<8x20xf32>
    %53 = tpu.matmul %52, %51, %cst_25 {dimension_numbers = #tpu.dot_dimension_numbers<[1], [0], [0], [1], [0, 0, 1, 1], [], []>} : vector<8x20xbf16>, vector<20x20xbf16>, vector<8x20xf32> -> vector<8x20xf32>
    %c18 = arith.constant 18 : index
    %c0_26 = arith.constant 0 : index
    %54 = vector.load %arg2[%c18, %c0_26] : memref<24x256xf32, #tpu.memory_space<vmem>>, vector<1x20xf32>
    %55 = vector.broadcast %54 : vector<1x20xf32> to vector<8x20xf32>
    %56 = arith.addf %53, %55 : vector<8x20xf32>
    %cst_27 = arith.constant 0.000000e+00 : f32
    %57 = vector.broadcast %cst_27 : f32 to vector<8x20xf32>
    %58 = arith.maximumf %56, %57 : vector<8x20xf32>
    %c720 = arith.constant 720 : index
    %c0_28 = arith.constant 0 : index
    %59 = vector.load %arg1[%c720, %c0_28] : memref<1616x256xbf16, #tpu.memory_space<vmem>>, vector<20x44xbf16>
    %60 = arith.truncf %58 : vector<8x20xf32> to vector<8x20xbf16>
    %cst_29 = arith.constant dense<0.000000e+00> : vector<8x44xf32>
    %61 = tpu.matmul %60, %59, %cst_29 {dimension_numbers = #tpu.dot_dimension_numbers<[1], [0], [0], [1], [0, 0, 1, 1], [], []>} : vector<8x20xbf16>, vector<20x44xbf16>, vector<8x44xf32> -> vector<8x44xf32>
    %c6 = arith.constant 6 : index
    %c0_30 = arith.constant 0 : index
    %62 = vector.load %arg2[%c6, %c0_30] : memref<24x256xf32, #tpu.memory_space<vmem>>, vector<1x44xf32>
    %63 = vector.broadcast %62 : vector<1x44xf32> to vector<8x44xf32>
    %64 = arith.addf %61, %63 : vector<8x44xf32>
    %cst_31 = arith.constant 0.000000e+00 : f32
    %65 = vector.broadcast %cst_31 : f32 to vector<8x44xf32>
    %66 = arith.maximumf %64, %65 : vector<8x44xf32>
    %c752 = arith.constant 752 : index
    %c0_32 = arith.constant 0 : index
    %67 = vector.load %arg1[%c752, %c0_32] : memref<1616x256xbf16, #tpu.memory_space<vmem>>, vector<44x92xbf16>
    %68 = arith.truncf %66 : vector<8x44xf32> to vector<8x44xbf16>
    %cst_33 = arith.constant dense<0.000000e+00> : vector<8x92xf32>
    %69 = tpu.matmul %68, %67, %cst_33 {dimension_numbers = #tpu.dot_dimension_numbers<[1], [0], [0], [1], [0, 0, 1, 1], [], []>} : vector<8x44xbf16>, vector<44x92xbf16>, vector<8x92xf32> -> vector<8x92xf32>
    %c7 = arith.constant 7 : index
    %c0_34 = arith.constant 0 : index
    %70 = vector.load %arg2[%c7, %c0_34] : memref<24x256xf32, #tpu.memory_space<vmem>>, vector<1x92xf32>
    %71 = vector.broadcast %70 : vector<1x92xf32> to vector<8x92xf32>
    %72 = arith.addf %69, %71 : vector<8x92xf32>
    %cst_35 = arith.constant 1.000000e+00 : f32
    %73 = vector.broadcast %cst_35 : f32 to vector<8x92xf32>
    %74 = arith.addf %73, %72 : vector<8x92xf32>
    %75 = arith.mulf %34, %74 : vector<8x92xf32>
    %c800 = arith.constant 800 : index
    %c0_36 = arith.constant 0 : index
    %76 = vector.load %arg1[%c800, %c0_36] : memref<1616x256xbf16, #tpu.memory_space<vmem>>, vector<92x44xbf16>
    %77 = arith.truncf %75 : vector<8x92xf32> to vector<8x92xbf16>
    %cst_37 = arith.constant dense<0.000000e+00> : vector<8x44xf32>
    %78 = tpu.matmul %77, %76, %cst_37 {dimension_numbers = #tpu.dot_dimension_numbers<[1], [0], [0], [1], [0, 0, 1, 1], [], []>} : vector<8x92xbf16>, vector<92x44xbf16>, vector<8x44xf32> -> vector<8x44xf32>
    %c8 = arith.constant 8 : index
    %c0_38 = arith.constant 0 : index
    %79 = vector.load %arg2[%c8, %c0_38] : memref<24x256xf32, #tpu.memory_space<vmem>>, vector<1x44xf32>
    %80 = vector.broadcast %79 : vector<1x44xf32> to vector<8x44xf32>
    %81 = arith.addf %78, %80 : vector<8x44xf32>
    %82 = arith.mulf %81, %81 : vector<8x44xf32>
    %c896 = arith.constant 896 : index
    %c0_39 = arith.constant 0 : index
    %83 = vector.load %arg1[%c896, %c0_39] : memref<1616x256xbf16, #tpu.memory_space<vmem>>, vector<44x44xbf16>
    %84 = arith.truncf %82 : vector<8x44xf32> to vector<8x44xbf16>
    %cst_40 = arith.constant dense<0.000000e+00> : vector<8x44xf32>
    %85 = tpu.matmul %84, %83, %cst_40 {dimension_numbers = #tpu.dot_dimension_numbers<[1], [0], [0], [1], [0, 0, 1, 1], [], []>} : vector<8x44xbf16>, vector<44x44xbf16>, vector<8x44xf32> -> vector<8x44xf32>
    %c9 = arith.constant 9 : index
    %c0_41 = arith.constant 0 : index
    %86 = vector.load %arg2[%c9, %c0_41] : memref<24x256xf32, #tpu.memory_space<vmem>>, vector<1x44xf32>
    %87 = vector.broadcast %86 : vector<1x44xf32> to vector<8x44xf32>
    %88 = arith.addf %85, %87 : vector<8x44xf32>
    %cst_42 = arith.constant 9.99999997E-7 : f32
    %89 = vector.broadcast %cst_42 : f32 to vector<8x44xf32>
    %90 = arith.maximumf %88, %89 : vector<8x44xf32>
    %91 = math.rsqrt %90 : vector<8x44xf32>
    %92 = arith.mulf %81, %91 : vector<8x44xf32>
    %c944 = arith.constant 944 : index
    %c0_43 = arith.constant 0 : index
    %93 = vector.load %arg1[%c944, %c0_43] : memref<1616x256xbf16, #tpu.memory_space<vmem>>, vector<44x24xbf16>
    %94 = arith.truncf %92 : vector<8x44xf32> to vector<8x44xbf16>
    %cst_44 = arith.constant dense<0.000000e+00> : vector<8x24xf32>
    %95 = tpu.matmul %94, %93, %cst_44 {dimension_numbers = #tpu.dot_dimension_numbers<[1], [0], [0], [1], [0, 0, 1, 1], [], []>} : vector<8x44xbf16>, vector<44x24xbf16>, vector<8x24xf32> -> vector<8x24xf32>
    %c10 = arith.constant 10 : index
    %c0_45 = arith.constant 0 : index
    %96 = vector.load %arg2[%c10, %c0_45] : memref<24x256xf32, #tpu.memory_space<vmem>>, vector<1x24xf32>
    %97 = vector.broadcast %96 : vector<1x24xf32> to vector<8x24xf32>
    %98 = arith.addf %95, %97 : vector<8x24xf32>
    %c992 = arith.constant 992 : index
    %c0_46 = arith.constant 0 : index
    %99 = vector.load %arg1[%c992, %c0_46] : memref<1616x256xbf16, #tpu.memory_space<vmem>>, vector<24x20xbf16>
    %100 = arith.truncf %98 : vector<8x24xf32> to vector<8x24xbf16>
    %cst_47 = arith.constant dense<0.000000e+00> : vector<8x20xf32>
    %101 = tpu.matmul %100, %99, %cst_47 {dimension_numbers = #tpu.dot_dimension_numbers<[1], [0], [0], [1], [0, 0, 1, 1], [], []>} : vector<8x24xbf16>, vector<24x20xbf16>, vector<8x20xf32> -> vector<8x20xf32>
    %c11 = arith.constant 11 : index
    %c0_48 = arith.constant 0 : index
    %102 = vector.load %arg2[%c11, %c0_48] : memref<24x256xf32, #tpu.memory_space<vmem>>, vector<1x20xf32>
    %103 = vector.broadcast %102 : vector<1x20xf32> to vector<8x20xf32>
    %104 = arith.addf %101, %103 : vector<8x20xf32>
    %cst_49 = arith.constant 0.000000e+00 : f32
    %105 = vector.broadcast %cst_49 : f32 to vector<8x20xf32>
    %106 = arith.maximumf %104, %105 : vector<8x20xf32>
    %c1024 = arith.constant 1024 : index
    %c0_50 = arith.constant 0 : index
    %107 = vector.load %arg1[%c1024, %c0_50] : memref<1616x256xbf16, #tpu.memory_space<vmem>>, vector<20x8xbf16>
    %108 = arith.truncf %106 : vector<8x20xf32> to vector<8x20xbf16>
    %cst_51 = arith.constant dense<0.000000e+00> : vector<8x8xf32>
    %109 = tpu.matmul %108, %107, %cst_51 {dimension_numbers = #tpu.dot_dimension_numbers<[1], [0], [0], [1], [0, 0, 1, 1], [], []>} : vector<8x20xbf16>, vector<20x8xbf16>, vector<8x8xf32> -> vector<8x8xf32>
    %c12 = arith.constant 12 : index
    %c0_52 = arith.constant 0 : index
    %110 = vector.load %arg2[%c12, %c0_52] : memref<24x256xf32, #tpu.memory_space<vmem>>, vector<1x8xf32>
    %111 = vector.broadcast %110 : vector<1x8xf32> to vector<8x8xf32>
    %112 = arith.addf %109, %111 : vector<8x8xf32>
    %cst_53 = arith.constant 0.000000e+00 : f32
    %113 = vector.broadcast %cst_53 : f32 to vector<8x8xf32>
    %114 = arith.maximumf %112, %113 : vector<8x8xf32>
    %c1472 = arith.constant 1472 : index
    %c0_54 = arith.constant 0 : index
    %115 = vector.load %arg1[%c1472, %c0_54] : memref<1616x256xbf16, #tpu.memory_space<vmem>>, vector<8x8xbf16>
    %116 = arith.truncf %114 : vector<8x8xf32> to vector<8x8xbf16>
    %cst_55 = arith.constant dense<0.000000e+00> : vector<8x8xf32>
    %117 = tpu.matmul %116, %115, %cst_55 {dimension_numbers = #tpu.dot_dimension_numbers<[1], [0], [0], [1], [0, 0, 1, 1], [], []>} : vector<8x8xbf16>, vector<8x8xbf16>, vector<8x8xf32> -> vector<8x8xf32>
    %c19 = arith.constant 19 : index
    %c0_56 = arith.constant 0 : index
    %118 = vector.load %arg2[%c19, %c0_56] : memref<24x256xf32, #tpu.memory_space<vmem>>, vector<1x8xf32>
    %119 = vector.broadcast %118 : vector<1x8xf32> to vector<8x8xf32>
    %120 = arith.addf %117, %119 : vector<8x8xf32>
    %cst_57 = arith.constant 0.000000e+00 : f32
    %121 = vector.broadcast %cst_57 : f32 to vector<8x8xf32>
    %122 = arith.maximumf %120, %121 : vector<8x8xf32>
    %c1056 = arith.constant 1056 : index
    %c0_58 = arith.constant 0 : index
    %123 = vector.load %arg1[%c1056, %c0_58] : memref<1616x256xbf16, #tpu.memory_space<vmem>>, vector<8x20xbf16>
    %124 = arith.truncf %122 : vector<8x8xf32> to vector<8x8xbf16>
    %cst_59 = arith.constant dense<0.000000e+00> : vector<8x20xf32>
    %125 = tpu.matmul %124, %123, %cst_59 {dimension_numbers = #tpu.dot_dimension_numbers<[1], [0], [0], [1], [0, 0, 1, 1], [], []>} : vector<8x8xbf16>, vector<8x20xbf16>, vector<8x20xf32> -> vector<8x20xf32>
    %c13 = arith.constant 13 : index
    %c0_60 = arith.constant 0 : index
    %126 = vector.load %arg2[%c13, %c0_60] : memref<24x256xf32, #tpu.memory_space<vmem>>, vector<1x20xf32>
    %127 = vector.broadcast %126 : vector<1x20xf32> to vector<8x20xf32>
    %128 = arith.addf %125, %127 : vector<8x20xf32>
    %cst_61 = arith.constant 0.000000e+00 : f32
    %129 = vector.broadcast %cst_61 : f32 to vector<8x20xf32>
    %130 = arith.maximumf %128, %129 : vector<8x20xf32>
    %c1072 = arith.constant 1072 : index
    %c0_62 = arith.constant 0 : index
    %131 = vector.load %arg1[%c1072, %c0_62] : memref<1616x256xbf16, #tpu.memory_space<vmem>>, vector<20x24xbf16>
    %132 = arith.truncf %130 : vector<8x20xf32> to vector<8x20xbf16>
    %cst_63 = arith.constant dense<0.000000e+00> : vector<8x24xf32>
    %133 = tpu.matmul %132, %131, %cst_63 {dimension_numbers = #tpu.dot_dimension_numbers<[1], [0], [0], [1], [0, 0, 1, 1], [], []>} : vector<8x20xbf16>, vector<20x24xbf16>, vector<8x24xf32> -> vector<8x24xf32>
    %c14 = arith.constant 14 : index
    %c0_64 = arith.constant 0 : index
    %134 = vector.load %arg2[%c14, %c0_64] : memref<24x256xf32, #tpu.memory_space<vmem>>, vector<1x24xf32>
    %135 = vector.broadcast %134 : vector<1x24xf32> to vector<8x24xf32>
    %136 = arith.addf %133, %135 : vector<8x24xf32>
    %cst_65 = arith.constant 1.000000e+00 : f32
    %137 = vector.broadcast %cst_65 : f32 to vector<8x24xf32>
    %138 = arith.addf %137, %136 : vector<8x24xf32>
    %139 = arith.mulf %98, %138 : vector<8x24xf32>
    %c1104 = arith.constant 1104 : index
    %c0_66 = arith.constant 0 : index
    %140 = vector.load %arg1[%c1104, %c0_66] : memref<1616x256xbf16, #tpu.memory_space<vmem>>, vector<188x24xbf16>
    %141 = arith.truncf %17 : vector<8x188xf32> to vector<8x188xbf16>
    %cst_67 = arith.constant dense<0.000000e+00> : vector<8x24xf32>
    %142 = tpu.matmul %141, %140, %cst_67 {dimension_numbers = #tpu.dot_dimension_numbers<[1], [0], [0], [1], [0, 0, 1, 1], [], []>} : vector<8x188xbf16>, vector<188x24xbf16>, vector<8x24xf32> -> vector<8x24xf32>
    %c15 = arith.constant 15 : index
    %c0_68 = arith.constant 0 : index
    %143 = vector.load %arg2[%c15, %c0_68] : memref<24x256xf32, #tpu.memory_space<vmem>>, vector<1x24xf32>
    %144 = vector.broadcast %143 : vector<1x24xf32> to vector<8x24xf32>
    %145 = arith.addf %142, %144 : vector<8x24xf32>
    %c1296 = arith.constant 1296 : index
    %c0_69 = arith.constant 0 : index
    %146 = vector.load %arg1[%c1296, %c0_69] : memref<1616x256xbf16, #tpu.memory_space<vmem>>, vector<92x24xbf16>
    %147 = arith.truncf %34 : vector<8x92xf32> to vector<8x92xbf16>
    %cst_70 = arith.constant dense<0.000000e+00> : vector<8x24xf32>
    %148 = tpu.matmul %147, %146, %cst_70 {dimension_numbers = #tpu.dot_dimension_numbers<[1], [0], [0], [1], [0, 0, 1, 1], [], []>} : vector<8x92xbf16>, vector<92x24xbf16>, vector<8x24xf32> -> vector<8x24xf32>
    %c16 = arith.constant 16 : index
    %c0_71 = arith.constant 0 : index
    %149 = vector.load %arg2[%c16, %c0_71] : memref<24x256xf32, #tpu.memory_space<vmem>>, vector<1x24xf32>
    %150 = vector.broadcast %149 : vector<1x24xf32> to vector<8x24xf32>
    %151 = arith.addf %148, %150 : vector<8x24xf32>
    %c1392 = arith.constant 1392 : index
    %c0_72 = arith.constant 0 : index
    %152 = vector.load %arg1[%c1392, %c0_72] : memref<1616x256xbf16, #tpu.memory_space<vmem>>, vector<44x24xbf16>
    %153 = arith.truncf %92 : vector<8x44xf32> to vector<8x44xbf16>
    %cst_73 = arith.constant dense<0.000000e+00> : vector<8x24xf32>
    %154 = tpu.matmul %153, %152, %cst_73 {dimension_numbers = #tpu.dot_dimension_numbers<[1], [0], [0], [1], [0, 0, 1, 1], [], []>} : vector<8x44xbf16>, vector<44x24xbf16>, vector<8x24xf32> -> vector<8x24xf32>
    %c17 = arith.constant 17 : index
    %c0_74 = arith.constant 0 : index
    %155 = vector.load %arg2[%c17, %c0_74] : memref<24x256xf32, #tpu.memory_space<vmem>>, vector<1x24xf32>
    %156 = vector.broadcast %155 : vector<1x24xf32> to vector<8x24xf32>
    %157 = arith.addf %154, %156 : vector<8x24xf32>
    %c1488 = arith.constant 1488 : index
    %c0_75 = arith.constant 0 : index
    %158 = vector.load %arg1[%c1488, %c0_75] : memref<1616x256xbf16, #tpu.memory_space<vmem>>, vector<24x128xbf16>
    %159 = arith.truncf %139 : vector<8x24xf32> to vector<8x24xbf16>
    %cst_76 = arith.constant dense<0.000000e+00> : vector<8x128xf32>
    %160 = tpu.matmul %159, %158, %cst_76 {dimension_numbers = #tpu.dot_dimension_numbers<[1], [0], [0], [1], [0, 0, 1, 1], [], []>} : vector<8x24xbf16>, vector<24x128xbf16>, vector<8x128xf32> -> vector<8x128xf32>
    %c1520 = arith.constant 1520 : index
    %c0_77 = arith.constant 0 : index
    %161 = vector.load %arg1[%c1520, %c0_77] : memref<1616x256xbf16, #tpu.memory_space<vmem>>, vector<24x128xbf16>
    %162 = arith.truncf %145 : vector<8x24xf32> to vector<8x24xbf16>
    %cst_78 = arith.constant dense<0.000000e+00> : vector<8x128xf32>
    %163 = tpu.matmul %162, %161, %cst_78 {dimension_numbers = #tpu.dot_dimension_numbers<[1], [0], [0], [1], [0, 0, 1, 1], [], []>} : vector<8x24xbf16>, vector<24x128xbf16>, vector<8x128xf32> -> vector<8x128xf32>
    %164 = arith.addf %160, %163 : vector<8x128xf32>
    %c1552 = arith.constant 1552 : index
    %c0_79 = arith.constant 0 : index
    %165 = vector.load %arg1[%c1552, %c0_79] : memref<1616x256xbf16, #tpu.memory_space<vmem>>, vector<24x128xbf16>
    %166 = arith.truncf %151 : vector<8x24xf32> to vector<8x24xbf16>
    %cst_80 = arith.constant dense<0.000000e+00> : vector<8x128xf32>
    %167 = tpu.matmul %166, %165, %cst_80 {dimension_numbers = #tpu.dot_dimension_numbers<[1], [0], [0], [1], [0, 0, 1, 1], [], []>} : vector<8x24xbf16>, vector<24x128xbf16>, vector<8x128xf32> -> vector<8x128xf32>
    %168 = arith.addf %164, %167 : vector<8x128xf32>
    %c1584 = arith.constant 1584 : index
    %c0_81 = arith.constant 0 : index
    %169 = vector.load %arg1[%c1584, %c0_81] : memref<1616x256xbf16, #tpu.memory_space<vmem>>, vector<24x128xbf16>
    %170 = arith.truncf %157 : vector<8x24xf32> to vector<8x24xbf16>
    %cst_82 = arith.constant dense<0.000000e+00> : vector<8x128xf32>
    %171 = tpu.matmul %170, %169, %cst_82 {dimension_numbers = #tpu.dot_dimension_numbers<[1], [0], [0], [1], [0, 0, 1, 1], [], []>} : vector<8x24xbf16>, vector<24x128xbf16>, vector<8x128xf32> -> vector<8x128xf32>
    %172 = arith.addf %168, %171 : vector<8x128xf32>
    %c20 = arith.constant 20 : index
    %c0_83 = arith.constant 0 : index
    %173 = vector.load %arg2[%c20, %c0_83] : memref<24x256xf32, #tpu.memory_space<vmem>>, vector<1x128xf32>
    %174 = vector.broadcast %173 : vector<1x128xf32> to vector<8x128xf32>
    %175 = arith.addf %172, %174 : vector<8x128xf32>
    %c0_84 = arith.constant 0 : index
    %c0_85 = arith.constant 0 : index
    %176 = vector.load %arg3[%c0_84, %c0_85] : memref<8x128xf32, #tpu.memory_space<vmem>>, vector<8x128xf32>
    tpu.vector_store %arg3[%c0_84, %c0_85], %175 {strides = array<i32>} : memref<8x128xf32, #tpu.memory_space<vmem>>, vector<8x128xf32>,
    return
  }
}

</mosaic_0001>

<llo_original>
// kernel: forward.1
$region0: #{forward.1}
  #allocation0 [shape = 'u32[]', space=smem, size = 0x4, offset = 0x4, fixed_abs, tag = 'smem constant byte address 0x4 - core index']
  #allocation1 [shape = 'u32[144,128]{1,0:T(1,128)}', space=vmem, size = 0x12000, scoped, tag = 'internal scratch']
  %s0 = inlined_call_operand.hbm [shape: f32[8,94], index: 0, kind: input, shape index: {}]
  %s1 = inlined_call_operand.hbm [shape: bf16[1616,256], index: 1, kind: input, shape index: {}]
  %s2 = inlined_call_operand.hbm [shape: f32[24,256], index: 2, kind: input, shape index: {}]
  %s3 = inlined_call_operand.vmem [shape: f32[8,128], index: 3, kind: output, shape index: {}]
  %s4 = sld [smem:[#allocation0]]
  $region34: #{forward.1} parent=0
    _
  %s6 = ssub.s32 1, %s4
  %s7 = scalar_select 0, %s6, %s4
  $region1: #{forward.1} parent=0
    #allocation2 [shape = 'u8[4096]{0}', space=vmem, size = 0x1000, scoped, tag = 'input window, operand 0, single buffered']
    #allocation3 [shape = 's32[1]{0}', space=sflag, size = 0x4, scoped, tag = 'scoped memory for forward.1']
    #allocation4 [shape = 'u8[827392]{0}', space=vmem, size = 0xca000, scoped, tag = 'input window, operand 1, single buffered']
    #allocation5 [shape = 's32[1]{0}', space=sflag, size = 0x4, scoped, tag = 'scoped memory for forward.1']
    #allocation6 [shape = 'u8[24576]{0}', space=vmem, size = 0x6000, scoped, tag = 'input window, operand 2, single buffered']
    %8 = vsyncpa [#allocation3], 0
    %9 = vsyncpa [#allocation5], 0
    // Predicated region
    $region2: #{forward.1} parent=1 // pred_check
      _
    $region3: #{forward.1} parent=1 // pred_check_branch
      %11 = sbr.rel (0) target = $region5
    $region4: #{forward.1} parent=1 // pred_region
      %s13 = ssub.s32 128, 128
      %14 = vsyncadd [#allocation3], %s13
      %s16 = sshll.u32 [#allocation2], 4
      %s17 = int_to_ptr.vmem [resolvable:$true] %s16
      %19 = dma.hbm_to_vmem [thread:$0]  %s0, 128, %s17, [#allocation3]
    $region5: #{forward.1} parent=1 // pred_fallthru
      _
    // Predicated region
    $region6: #{forward.1} parent=1 // pred_check
      _
    $region7: #{forward.1} parent=1 // pred_check_branch
      %21 = sbr.rel (0) target = $region9
    $region8: #{forward.1} parent=1 // pred_region
      %s23 = ssub.s32 25856, 25856
      %24 = vsyncadd [#allocation5], %s23
      %s25 = sshll.u32 [#allocation4], 4
      %s26 = int_to_ptr.vmem [resolvable:$true] %s25
      %31 = dma.hbm_to_vmem [thread:$0]  %s1, 25856, %s26, [#allocation5], 128, 128, 8
    $region9: #{forward.1} parent=1 // pred_fallthru
      _
    // Predicated region
    $region10: #{forward.1} parent=1 // pred_check
      _
    $region11: #{forward.1} parent=1 // pred_check_branch
      %33 = sbr.rel (0) target = $region13
    $region12: #{forward.1} parent=1 // pred_region
      %s35 = ssub.s32 768, 768
      %36 = vsyncadd [#allocation5], %s35
      %s37 = sshll.u32 [#allocation6], 4
      %s38 = int_to_ptr.vmem [resolvable:$true] %s37
      %43 = dma.hbm_to_vmem [thread:$0]  %s2, 768, %s38, [#allocation5], 256, 256, 16
    $region13: #{forward.1} parent=1 // pred_fallthru
      _
    // Predicated region
    $region14: #{forward.1} parent=1 // pred_check
      _
    $region15: #{forward.1} parent=1 // pred_check_branch
      %45 = sbr.rel (0) target = $region17
    $region16: #{forward.1} parent=1 // pred_region
      %46 = dma.done [#allocation3], 128
    $region17: #{forward.1} parent=1 // pred_fallthru
      _
    // Predicated region
    $region18: #{forward.1} parent=1 // pred_check
      _
    $region19: #{forward.1} parent=1 // pred_check_branch
      %48 = sbr.rel (0) target = $region21
    $region20: #{forward.1} parent=1 // pred_region
      %49 = dma.done [#allocation5], 25856
    $region21: #{forward.1} parent=1 // pred_fallthru
      _
    // Predicated region
    $region22: #{forward.1} parent=1 // pred_check
      _
    $region23: #{forward.1} parent=1 // pred_check_branch
      %51 = sbr.rel (0) target = $region25
    $region24: #{forward.1} parent=1 // pred_region
      %52 = dma.done [#allocation5], 768
    $region25: #{forward.1} parent=1 // pred_fallthru
      _
    %v54 = vld [vmem:[#allocation2] sm:$0xff]
    %v55 = vld [vmem:[#allocation4] sm:$0xff]
    %v56 = vld [vmem:[#allocation4 + $0x8] sm:$0xff]
    %v57 = vld [vmem:[#allocation4 + $0x10] sm:$0xff]
    %v58 = vld [vmem:[#allocation4 + $0x18] sm:$0xff]
    %v59 = vld [vmem:[#allocation4 + $0x20] sm:$0xff]
    %v60 = vld [vmem:[#allocation4 + $0x28] sm:$0xff]
    %v61 = vld [vmem:[#allocation4 + $0x30] sm:$0xff]
    %v62 = vld [vmem:[#allocation4 + $0x38] sm:$0xff]
    %v63 = vld [vmem:[#allocation4 + $0x40] sm:$0xff]
    %v64 = vld [vmem:[#allocation4 + $0x48] sm:$0xff]
    %v65 = vld [vmem:[#allocation4 + $0x50] sm:$0xff]
    %v66 = vld [vmem:[#allocation4 + $0x58] sm:$0x77]
    %v67 = vpack.c.bf16 %v54, %v54
    %v68 = vld [vmem:[#allocation6] ss:$8 sm:$0x3]
    %v70 = vlaneseq
    %v71 = vshrl.u32 %v70, 7
    %v72 = vsub.s32 0, %v71
    %v73 = vrot.slane %v68, %v72
    %v74 = vlaneseq
    %v75 = vshrl.u32 %v74, 7
    %v76 = vsub.s32 1, %v75
    %v77 = vrot.slane %v68, %v76
    %v92 = vunpack.c.l.b16 %v55
    %v93 = vunpack.c.h.b16 %v55
    %v94 = vunpack.c.l.b16 %v56
    %v95 = vunpack.c.h.b16 %v56
    %v96 = vunpack.c.l.b16 %v57
    %v97 = vunpack.c.h.b16 %v57
    %v98 = vunpack.c.l.b16 %v58
    %v99 = vunpack.c.h.b16 %v58
    %v100 = vunpack.c.l.b16 %v59
    %v101 = vunpack.c.h.b16 %v59
    %v102 = vunpack.c.l.b16 %v60
    %v103 = vunpack.c.h.b16 %v60
    %v104 = vunpack.c.l.b16 %v61
    %v105 = vunpack.c.h.b16 %v61
    %v106 = vunpack.c.l.b16 %v62
    %v107 = vunpack.c.h.b16 %v62
    %v108 = vunpack.c.l.b16 %v63
    %v109 = vunpack.c.h.b16 %v63
    %v110 = vunpack.c.l.b16 %v64
    %v111 = vunpack.c.h.b16 %v64
    %v112 = vunpack.c.l.b16 %v65
    %v113 = vunpack.c.h.b16 %v65
    %v114 = vunpack.c.l.b16 %v66
    %v115 = vunpack.c.h.b16 %v66
    %v116 = vpack.c.b16 %v94, %v92
    %v117 = vpack.c.b16 %v95, %v93
    %v118 = vpack.c.b16 %v98, %v96
    %v119 = vpack.c.b16 %v99, %v97
    %v120 = vpack.c.b16 %v102, %v100
    %v121 = vpack.c.b16 %v103, %v101
    %v122 = vpack.c.b16 %v106, %v104
    %v123 = vpack.c.b16 %v107, %v105
    %v124 = vpack.c.b16 %v110, %v108
    %v125 = vpack.c.b16 %v111, %v109
    %v126 = vpack.c.b16 %v114, %v112
    %v127 = vpack.c.b16 %v115, %v113
    %vm138 = vcmask 769024
    %v140 = vsel %vm138, %v67, 0
    %vm142 = vcmask 1046528
    %v144 = vsel %vm142, %v126, 0
    %v147 = vsel %vm142, %v127, 0
    %149 = vmatprep.subr.bf16.mxu0 0
    %150 = vmatpush1.bf16.msra.mxu0 0
    %151 = vmatprep.subr.bf16.mxu0 0
    %152 = vmatpush1.bf16.msra.mxu0 0
    %153 = vmatprep.subr.bf16.mxu0 %v147
    %154 = vmatpush1.bf16.msra.mxu0 %v144
    %155 = vmatprep.subr.bf16.mxu0 %v125
    %156 = vmatpush1.bf16.msra.mxu0 %v124
    %157 = vmatprep.subr.bf16.mxu0 %v123
    %158 = vmatpush1.bf16.msra.mxu0 %v122
    %159 = vmatprep.subr.bf16.mxu0 %v121
    %160 = vmatpush1.bf16.msra.mxu0 %v120
    %161 = vmatprep.subr.bf16.mxu0 %v119
    %162 = vmatpush1.bf16.msra.mxu0 %v118
    %163 = vmatprep.subr.bf16.mxu0 %v117
    %164 = vmatpush1.bf16.msra.mxu0 %v116
    %165 = vmatprep.subr.bf16.mxu0 0
    %166 = vmatpush2.bf16.msra.mxu0 0
    %167 = vmatprep.subr.bf16.mxu0 0
    %168 = vmatpush2.bf16.msra.mxu0 0
    %169 = vmatprep.subr.bf16.mxu0 0
    %170 = vmatpush2.bf16.msra.mxu0 0
    %171 = vmatprep.subr.bf16.mxu0 0
    %172 = vmatpush2.bf16.msra.mxu0 0
    %173 = vmatprep.subr.bf16.mxu0 0
    %174 = vmatpush2.bf16.msra.mxu0 0
    %175 = vmatprep.subr.bf16.mxu0 0
    %176 = vmatpush2.bf16.msra.mxu0 0
    %177 = vmatprep.subr.bf16.mxu0 0
    %178 = vmatpush2.bf16.msra.mxu0 0
    %179 = vmatprep.subr.bf16.mxu0 0
    %180 = vmatpush2.bf16.msra.mxu0 0
    %181 = vmatprep.mubr.bf16.mxu0 0
    %182 = vmatmul.mubr.bf16.gmra.mxu0 %v140
    %v183 = vpop.f32.mrf.mxu0
    %v184 = vadd.f32 %v73, %v183
    %v185 = vpop.f32.mrf.mxu0
    %v186 = vadd.f32 %v77, %v185
    %v187 = vpop.f32.mrf.mxu0
    %v188 = vpop.f32.mrf.mxu0
    %189 = vdwg.mxu0
    %v190 = vmul.f32 %v184, %v184
    %v191 = vmul.f32 %v186, %v186
    %v192 = vld [vmem:[#allocation4 + $0x60] sm:$0xff]
    %v193 = vld [vmem:[#allocation4 + $0x68] sm:$0xff]
    %v194 = vld [vmem:[#allocation4 + $0x70] sm:$0xff]
    %v195 = vld [vmem:[#allocation4 + $0x78] sm:$0xff]
    %v196 = vld [vmem:[#allocation4 + $0x80] sm:$0xff]
    %v197 = vld [vmem:[#allocation4 + $0x88] sm:$0xff]
    %v198 = vld [vmem:[#allocation4 + $0x90] sm:$0xff]
    %v199 = vld [vmem:[#allocation4 + $0x98] sm:$0xff]
    %v200 = vld [vmem:[#allocation4 + $0xa0] sm:$0xff]
    %v201 = vld [vmem:[#allocation4 + $0xa8] sm:$0xff]
    %v202 = vld [vmem:[#allocation4 + $0xb0] sm:$0xff]
    %v203 = vld [vmem:[#allocation4 + $0xb8] sm:$0xff]
    %v204 = vld [vmem:[#allocation4 + $0xc0] sm:$0xff]
    %v205 = vld [vmem:[#allocation4 + $0xc8] sm:$0xff]
    %v206 = vld [vmem:[#allocation4 + $0xd0] sm:$0xff]
    %v207 = vld [vmem:[#allocation4 + $0xd8] sm:$0xff]
    %v208 = vld [vmem:[#allocation4 + $0xe0] sm:$0xff]
    %v209 = vld [vmem:[#allocation4 + $0xe8] sm:$0xff]
    %v210 = vld [vmem:[#allocation4 + $0xf0] sm:$0xff]
    %v211 = vld [vmem:[#allocation4 + $0xf8] sm:$0xff]
    %v212 = vld [vmem:[#allocation4 + $0x100] sm:$0xff]
    %v213 = vld [vmem:[#allocation4 + $0x108] sm:$0xff]
    %v214 = vld [vmem:[#allocation4 + $0x110] sm:$0xff]
    %v215 = vld [vmem:[#allocation4 + $0x118] sm:$0x33]
    %v216 = vpack.c.bf16 %v190, %v190
    %v217 = vpack.c.bf16 %v191, %v191
    %s218 = scalar_lea.vmem [#allocation6], 1
    %v219 = vld [vmem:[%s218] ss:$8 sm:$0x3]
    %v221 = vlaneseq
    %v222 = vshrl.u32 %v221, 7
    %v223 = vsub.s32 0, %v222
    %v224 = vrot.slane %v219, %v223
    %v225 = vlaneseq
    %v226 = vshrl.u32 %v225, 7
    %v227 = vsub.s32 1, %v226
    %v228 = vrot.slane %v219, %v227
    %v255 = vunpack.c.l.b16 %v192
    %v256 = vunpack.c.h.b16 %v192
    %v257 = vunpack.c.l.b16 %v193
    %v258 = vunpack.c.h.b16 %v193
    %v259 = vunpack.c.l.b16 %v194
    %v260 = vunpack.c.h.b16 %v194
    %v261 = vunpack.c.l.b16 %v195
    %v262 = vunpack.c.h.b16 %v195
    %v263 = vunpack.c.l.b16 %v196
    %v264 = vunpack.c.h.b16 %v196
    %v265 = vunpack.c.l.b16 %v197
    %v266 = vunpack.c.h.b16 %v197
    %v267 = vunpack.c.l.b16 %v198
    %v268 = vunpack.c.h.b16 %v198
    %v269 = vunpack.c.l.b16 %v199
    %v270 = vunpack.c.h.b16 %v199
    %v271 = vunpack.c.l.b16 %v200
    %v272 = vunpack.c.h.b16 %v200
    %v273 = vunpack.c.l.b16 %v201
    %v274 = vunpack.c.h.b16 %v201
    %v275 = vunpack.c.l.b16 %v202
    %v276 = vunpack.c.h.b16 %v202
    %v277 = vunpack.c.l.b16 %v203
    %v278 = vunpack.c.h.b16 %v203
    %v279 = vunpack.c.l.b16 %v204
    %v280 = vunpack.c.h.b16 %v204
    %v281 = vunpack.c.l.b16 %v205
    %v282 = vunpack.c.h.b16 %v205
    %v283 = vunpack.c.l.b16 %v206
    %v284 = vunpack.c.h.b16 %v206
    %v285 = vunpack.c.l.b16 %v207
    %v286 = vunpack.c.h.b16 %v207
    %v287 = vunpack.c.l.b16 %v208
    %v288 = vunpack.c.h.b16 %v208
    %v289 = vunpack.c.l.b16 %v209
    %v290 = vunpack.c.h.b16 %v209
    %v291 = vunpack.c.l.b16 %v210
    %v292 = vunpack.c.h.b16 %v210
    %v293 = vunpack.c.l.b16 %v211
    %v294 = vunpack.c.h.b16 %v211
    %v295 = vunpack.c.l.b16 %v212
    %v296 = vunpack.c.h.b16 %v212
    %v297 = vunpack.c.l.b16 %v213
    %v298 = vunpack.c.h.b16 %v213
    %v299 = vunpack.c.l.b16 %v214
    %v300 = vunpack.c.h.b16 %v214
    %v301 = vunpack.c.l.b16 %v215
    %v302 = vunpack.c.h.b16 %v215
    %v303 = vpack.c.b16 %v257, %v255
    %v304 = vpack.c.b16 %v258, %v256
    %v305 = vpack.c.b16 %v261, %v259
    %v306 = vpack.c.b16 %v262, %v260
    %v307 = vpack.c.b16 %v265, %v263
    %v308 = vpack.c.b16 %v266, %v264
    %v309 = vpack.c.b16 %v269, %v267
    %v310 = vpack.c.b16 %v270, %v268
    %v311 = vpack.c.b16 %v273, %v271
    %v312 = vpack.c.b16 %v274, %v272
    %v313 = vpack.c.b16 %v277, %v275
    %v314 = vpack.c.b16 %v278, %v276
    %v315 = vpack.c.b16 %v281, %v279
    %v316 = vpack.c.b16 %v282, %v280
    %v317 = vpack.c.b16 %v285, %v283
    %v318 = vpack.c.b16 %v286, %v284
    %v319 = vpack.c.b16 %v289, %v287
    %v320 = vpack.c.b16 %v290, %v288
    %v321 = vpack.c.b16 %v293, %v291
    %v322 = vpack.c.b16 %v294, %v292
    %v323 = vpack.c.b16 %v297, %v295
    %v324 = vpack.c.b16 %v298, %v296
    %v325 = vpack.c.b16 %v301, %v299
    %v326 = vpack.c.b16 %v302, %v300
    %vm349 = vcmask 490496
    %v351 = vsel %vm349, %v217, 0
    %vm353 = vcmask 1045504
    %v355 = vsel %vm353, %v325, 0
    %v358 = vsel %vm353, %v326, 0
    %360 = vmatprep.subr.bf16.mxu0 %v318
    %361 = vmatpush1.bf16.msra.mxu0 %v317
    %362 = vmatprep.subr.bf16.mxu0 %v316
    %363 = vmatpush1.bf16.msra.mxu0 %v315
    %364 = vmatprep.subr.bf16.mxu0 %v314
    %365 = vmatpush1.bf16.msra.mxu0 %v313
    %366 = vmatprep.subr.bf16.mxu0 %v312
    %367 = vmatpush1.bf16.msra.mxu0 %v311
    %368 = vmatprep.subr.bf16.mxu0 %v310
    %369 = vmatpush1.bf16.msra.mxu0 %v309
    %370 = vmatprep.subr.bf16.mxu0 %v308
    %371 = vmatpush1.bf16.msra.mxu0 %v307
    %372 = vmatprep.subr.bf16.mxu0 %v306
    %373 = vmatpush1.bf16.msra.mxu0 %v305
    %374 = vmatprep.subr.bf16.mxu0 %v304
    %375 = vmatpush1.bf16.msra.mxu0 %v303
    %376 = vmatprep.subr.bf16.mxu0 0
    %377 = vmatpush2.bf16.msra.mxu0 0
    %378 = vmatprep.subr.bf16.mxu0 0
    %379 = vmatpush2.bf16.msra.mxu0 0
    %380 = vmatprep.subr.bf16.mxu0 0
    %381 = vmatpush2.bf16.msra.mxu0 0
    %382 = vmatprep.subr.bf16.mxu0 0
    %383 = vmatpush2.bf16.msra.mxu0 0
    %384 = vmatprep.subr.bf16.mxu0 %v358
    %385 = vmatpush2.bf16.msra.mxu0 %v355
    %386 = vmatprep.subr.bf16.mxu0 %v324
    %387 = vmatpush2.bf16.msra.mxu0 %v323
    %388 = vmatprep.subr.bf16.mxu0 %v322
    %389 = vmatpush2.bf16.msra.mxu0 %v321
    %390 = vmatprep.subr.bf16.mxu0 %v320
    %391 = vmatpush2.bf16.msra.mxu0 %v319
    %392 = vmatprep.mubr.bf16.mxu0 %v351
    %393 = vmatmul.mubr.bf16.gmra.mxu0 %v216
    %v394 = vpop.f32.mrf.mxu0
    %v395 = vadd.f32 %v224, %v394
    %v396 = vpop.f32.mrf.mxu0
    %v397 = vadd.f32 %v228, %v396
    %v398 = vpop.f32.mrf.mxu0
    %v399 = vpop.f32.mrf.mxu0
    %400 = vdwg.mxu0
    %v401 = vmax.f32 %v395, 1e-06
    %v402 = vmax.f32 %v397, 1e-06
    %v403 = vrsqrt.pop %v401
    %v404 = vrsqrt.pop %v402
    %v405 = vmul.f32 %v184, %v403
    %v406 = vmul.f32 %v186, %v404
    %v407 = vld [vmem:[#allocation4 + $0x120] sm:$0xf]
    %v408 = vld [vmem:[#allocation4 + $0x128] sm:$0xf]
    %v409 = vld [vmem:[#allocation4 + $0x130] sm:$0xf]
    %v410 = vld [vmem:[#allocation4 + $0x138] sm:$0xf]
    %v411 = vld [vmem:[#allocation4 + $0x140] sm:$0xf]
    %v412 = vld [vmem:[#allocation4 + $0x148] sm:$0xf]
    %v413 = vld [vmem:[#allocation4 + $0x150] sm:$0xf]
    %v414 = vld [vmem:[#allocation4 + $0x158] sm:$0xf]
    %v415 = vld [vmem:[#allocation4 + $0x160] sm:$0xf]
    %v416 = vld [vmem:[#allocation4 + $0x168] sm:$0xf]
    %v417 = vld [vmem:[#allocation4 + $0x170] sm:$0xf]
    %v418 = vld [vmem:[#allocation4 + $0x178] sm:$0xf]
    %v419 = vld [vmem:[#allocation4 + $0x180] sm:$0xf]
    %v420 = vld [vmem:[#allocation4 + $0x188] sm:$0xf]
    %v421 = vld [vmem:[#allocation4 + $0x190] sm:$0xf]
    %v422 = vld [vmem:[#allocation4 + $0x198] sm:$0xf]
    %v423 = vld [vmem:[#allocation4 + $0x1a0] sm:$0xf]
    %v424 = vld [vmem:[#allocation4 + $0x1a8] sm:$0xf]
    %v425 = vld [vmem:[#allocation4 + $0x1b0] sm:$0xf]
    %v426 = vld [vmem:[#allocation4 + $0x1b8] sm:$0xf]
    %v427 = vld [vmem:[#allocation4 + $0x1c0] sm:$0xf]
    %v428 = vld [vmem:[#allocation4 + $0x1c8] sm:$0xf]
    %v429 = vld [vmem:[#allocation4 + $0x1d0] sm:$0xf]
    %v430 = vld [vmem:[#allocation4 + $0x1d8] sm:$0x3]
    %v431 = vpack.c.bf16 %v405, %v405
    %v432 = vpack.c.bf16 %v406, %v406
    %v433 = vld [vmem:[#allocation6 + $0x2] ss:$0 sm:$0xff]
    %v458 = vunpack.c.l.b16 %v407
    %v459 = vunpack.c.l.b16 %v408
    %v460 = vunpack.c.l.b16 %v409
    %v461 = vunpack.c.l.b16 %v410
    %v462 = vunpack.c.l.b16 %v411
    %v463 = vunpack.c.l.b16 %v412
    %v464 = vunpack.c.l.b16 %v413
    %v465 = vunpack.c.l.b16 %v414
    %v466 = vunpack.c.l.b16 %v415
    %v467 = vunpack.c.l.b16 %v416
    %v468 = vunpack.c.l.b16 %v417
    %v469 = vunpack.c.l.b16 %v418
    %v470 = vunpack.c.l.b16 %v419
    %v471 = vunpack.c.l.b16 %v420
    %v472 = vunpack.c.l.b16 %v421
    %v473 = vunpack.c.l.b16 %v422
    %v474 = vunpack.c.l.b16 %v423
    %v475 = vunpack.c.l.b16 %v424
    %v476 = vunpack.c.l.b16 %v425
    %v477 = vunpack.c.l.b16 %v426
    %v478 = vunpack.c.l.b16 %v427
    %v479 = vunpack.c.l.b16 %v428
    %v480 = vunpack.c.l.b16 %v429
    %v481 = vunpack.c.l.b16 %v430
    %v482 = vpack.c.b16 %v459, %v458
    %v483 = vpack.c.b16 %v461, %v460
    %v484 = vpack.c.b16 %v463, %v462
    %v485 = vpack.c.b16 %v465, %v464
    %v486 = vpack.c.b16 %v467, %v466
    %v487 = vpack.c.b16 %v469, %v468
    %v488 = vpack.c.b16 %v471, %v470
    %v489 = vpack.c.b16 %v473, %v472
    %v490 = vpack.c.b16 %v475, %v474
    %v491 = vpack.c.b16 %v477, %v476
    %v492 = vpack.c.b16 %v479, %v478
    %v493 = vpack.c.b16 %v481, %v480
    %v506 = vsel %vm349, %v432, 0
    %v509 = vsel %vm353, %v493, 0
    %511 = vmatprep.subr.bf16.mxu0 0
    %512 = vmatpush1.bf16.msra.mxu0 %v489
    %513 = vmatprep.subr.bf16.mxu0 0
    %514 = vmatpush1.bf16.msra.mxu0 %v488
    %515 = vmatprep.subr.bf16.mxu0 0
    %516 = vmatpush1.bf16.msra.mxu0 %v487
    %517 = vmatprep.subr.bf16.mxu0 0
    %518 = vmatpush1.bf16.msra.mxu0 %v486
    %519 = vmatprep.subr.bf16.mxu0 0
    %520 = vmatpush1.bf16.msra.mxu0 %v485
    %521 = vmatprep.subr.bf16.mxu0 0
    %522 = vmatpush1.bf16.msra.mxu0 %v484
    %523 = vmatprep.subr.bf16.mxu0 0
    %524 = vmatpush1.bf16.msra.mxu0 %v483
    %525 = vmatprep.subr.bf16.mxu0 0
    %526 = vmatpush1.bf16.msra.mxu0 %v482
    %527 = vmatprep.subr.bf16.mxu0 0
    %528 = vmatpush2.bf16.msra.mxu0 0
    %529 = vmatprep.subr.bf16.mxu0 0
    %530 = vmatpush2.bf16.msra.mxu0 0
    %531 = vmatprep.subr.bf16.mxu0 0
    %532 = vmatpush2.bf16.msra.mxu0 0
    %533 = vmatprep.subr.bf16.mxu0 0
    %534 = vmatpush2.bf16.msra.mxu0 0
    %535 = vmatprep.subr.bf16.mxu0 0
    %536 = vmatpush2.bf16.msra.mxu0 %v509
    %537 = vmatprep.subr.bf16.mxu0 0
    %538 = vmatpush2.bf16.msra.mxu0 %v492
    %539 = vmatprep.subr.bf16.mxu0 0
    %540 = vmatpush2.bf16.msra.mxu0 %v491
    %541 = vmatprep.subr.bf16.mxu0 0
    %542 = vmatpush2.bf16.msra.mxu0 %v490
    %543 = vmatprep.mubr.bf16.mxu0 %v506
    %544 = vmatmul.mubr.bf16.gmra.mxu0 %v431
    %v545 = vpop.f32.mrf.mxu0
    %v546 = vadd.f32 %v433, %v545
    %v547 = vpop.f32.mrf.mxu0
    %v548 = vpop.f32.mrf.mxu0
    %v549 = vpop.f32.mrf.mxu0
    %550 = vdwg.mxu0
    %v551 = vmul.f32 %v546, %v546
    %v552 = vld [vmem:[#allocation4 + $0x1e0] sm:$0xf]
    %v553 = vld [vmem:[#allocation4 + $0x1e8] sm:$0xf]
    %v554 = vld [vmem:[#allocation4 + $0x1f0] sm:$0xf]
    %v555 = vld [vmem:[#allocation4 + $0x1f8] sm:$0xf]
    %v556 = vld [vmem:[#allocation4 + $0x200] sm:$0xf]
    %v557 = vld [vmem:[#allocation4 + $0x208] sm:$0xf]
    %v558 = vld [vmem:[#allocation4 + $0x210] sm:$0xf]
    %v559 = vld [vmem:[#allocation4 + $0x218] sm:$0xf]
    %v560 = vld [vmem:[#allocation4 + $0x220] sm:$0xf]
    %v561 = vld [vmem:[#allocation4 + $0x228] sm:$0xf]
    %v562 = vld [vmem:[#allocation4 + $0x230] sm:$0xf]
    %v563 = vld [vmem:[#allocation4 + $0x238] sm:$0x3]
    %v564 = vpack.c.bf16 %v551, %v551
    %v565 = vld [vmem:[#allocation6 + $0x3] ss:$0 sm:$0xff]
    %v578 = vunpack.c.l.b16 %v552
    %v579 = vunpack.c.l.b16 %v553
    %v580 = vunpack.c.l.b16 %v554
    %v581 = vunpack.c.l.b16 %v555
    %v582 = vunpack.c.l.b16 %v556
    %v583 = vunpack.c.l.b16 %v557
    %v584 = vunpack.c.l.b16 %v558
    %v585 = vunpack.c.l.b16 %v559
    %v586 = vunpack.c.l.b16 %v560
    %v587 = vunpack.c.l.b16 %v561
    %v588 = vunpack.c.l.b16 %v562
    %v589 = vunpack.c.l.b16 %v563
    %v590 = vpack.c.b16 %v579, %v578
    %v591 = vpack.c.b16 %v581, %v580
    %v592 = vpack.c.b16 %v583, %v582
    %v593 = vpack.c.b16 %v585, %v584
    %v594 = vpack.c.b16 %v587, %v586
    %v595 = vpack.c.b16 %v589, %v588
    %vm601 = vcmask 752640
    %v603 = vsel %vm601, %v564, 0
    %v606 = vsel %vm353, %v595, 0
    %608 = vmatprep.subr.bf16.mxu0 0
    %609 = vmatpush1.bf16.msra.mxu0 0
    %610 = vmatprep.subr.bf16.mxu0 0
    %611 = vmatpush1.bf16.msra.mxu0 0
    %612 = vmatprep.subr.bf16.mxu0 0
    %613 = vmatpush1.bf16.msra.mxu0 %v606
    %614 = vmatprep.subr.bf16.mxu0 0
    %615 = vmatpush1.bf16.msra.mxu0 %v594
    %616 = vmatprep.subr.bf16.mxu0 0
    %617 = vmatpush1.bf16.msra.mxu0 %v593
    %618 = vmatprep.subr.bf16.mxu0 0
    %619 = vmatpush1.bf16.msra.mxu0 %v592
    %620 = vmatprep.subr.bf16.mxu0 0
    %621 = vmatpush1.bf16.msra.mxu0 %v591
    %622 = vmatprep.subr.bf16.mxu0 0
    %623 = vmatpush1.bf16.msra.mxu0 %v590
    %624 = vmatprep.subr.bf16.mxu0 0
    %625 = vmatpush2.bf16.msra.mxu0 0
    %626 = vmatprep.subr.bf16.mxu0 0
    %627 = vmatpush2.bf16.msra.mxu0 0
    %628 = vmatprep.subr.bf16.mxu0 0
    %629 = vmatpush2.bf16.msra.mxu0 0
    %630 = vmatprep.subr.bf16.mxu0 0
    %631 = vmatpush2.bf16.msra.mxu0 0
    %632 = vmatprep.subr.bf16.mxu0 0
    %633 = vmatpush2.bf16.msra.mxu0 0
    %634 = vmatprep.subr.bf16.mxu0 0
    %635 = vmatpush2.bf16.msra.mxu0 0
    %636 = vmatprep.subr.bf16.mxu0 0
    %637 = vmatpush2.bf16.msra.mxu0 0
    %638 = vmatprep.subr.bf16.mxu0 0
    %639 = vmatpush2.bf16.msra.mxu0 0
    %640 = vmatprep.mubr.bf16.mxu0 0
    %641 = vmatmul.mubr.bf16.gmra.mxu0 %v603
    %v642 = vpop.f32.mrf.mxu0
    %v643 = vadd.f32 %v565, %v642
    %v644 = vpop.f32.mrf.mxu0
    %v645 = vpop.f32.mrf.mxu0
    %v646 = vpop.f32.mrf.mxu0
    %647 = vdwg.mxu0
    %v648 = vmax.f32 %v643, 1e-06
    %v649 = vrsqrt.pop %v648
    %v650 = vmul.f32 %v546, %v649
    %v651 = vld [vmem:[#allocation4 + $0x240] sm:$0xf]
    %v652 = vld [vmem:[#allocation4 + $0x248] sm:$0xf]
    %v653 = vld [vmem:[#allocation4 + $0x250] sm:$0xf]
    %v654 = vld [vmem:[#allocation4 + $0x258] sm:$0xf]
    %v655 = vld [vmem:[#allocation4 + $0x260] sm:$0xf]
    %v656 = vld [vmem:[#allocation4 + $0x268] sm:$0xf]
    %v657 = vld [vmem:[#allocation4 + $0x270] sm:$0xf]
    %v658 = vld [vmem:[#allocation4 + $0x278] sm:$0xf]
    %v659 = vld [vmem:[#allocation4 + $0x280] sm:$0xf]
    %v660 = vld [vmem:[#allocation4 + $0x288] sm:$0xf]
    %v661 = vld [vmem:[#allocation4 + $0x290] sm:$0xf]
    %v662 = vld [vmem:[#allocation4 + $0x298] sm:$0x3]
    %v663 = vpack.c.bf16 %v650, %v650
    %v664 = vld [vmem:[#allocation6 + $0x4] ss:$0 sm:$0xff]
    %v677 = vunpack.c.l.b16 %v651
    %v678 = vunpack.c.l.b16 %v652
    %v679 = vunpack.c.l.b16 %v653
    %v680 = vunpack.c.l.b16 %v654
    %v681 = vunpack.c.l.b16 %v655
    %v682 = vunpack.c.l.b16 %v656
    %v683 = vunpack.c.l.b16 %v657
    %v684 = vunpack.c.l.b16 %v658
    %v685 = vunpack.c.l.b16 %v659
    %v686 = vunpack.c.l.b16 %v660
    %v687 = vunpack.c.l.b16 %v661
    %v688 = vunpack.c.l.b16 %v662
    %v689 = vpack.c.b16 %v678, %v677
    %v690 = vpack.c.b16 %v680, %v679
    %v691 = vpack.c.b16 %v682, %v681
    %v692 = vpack.c.b16 %v684, %v683
    %v693 = vpack.c.b16 %v686, %v685
    %v694 = vpack.c.b16 %v688, %v687
    %v701 = vsel %vm601, %v663, 0
    %v704 = vsel %vm353, %v694, 0
    %706 = vmatprep.subr.bf16.mxu0 0
    %707 = vmatpush1.bf16.msra.mxu0 0
    %708 = vmatprep.subr.bf16.mxu0 0
    %709 = vmatpush1.bf16.msra.mxu0 0
    %710 = vmatprep.subr.bf16.mxu0 0
    %711 = vmatpush1.bf16.msra.mxu0 %v704
    %712 = vmatprep.subr.bf16.mxu0 0
    %713 = vmatpush1.bf16.msra.mxu0 %v693
    %714 = vmatprep.subr.bf16.mxu0 0
    %715 = vmatpush1.bf16.msra.mxu0 %v692
    %716 = vmatprep.subr.bf16.mxu0 0
    %717 = vmatpush1.bf16.msra.mxu0 %v691
    %718 = vmatprep.subr.bf16.mxu0 0
    %719 = vmatpush1.bf16.msra.mxu0 %v690
    %720 = vmatprep.subr.bf16.mxu0 0
    %721 = vmatpush1.bf16.msra.mxu0 %v689
    %722 = vmatprep.subr.bf16.mxu0 0
    %723 = vmatpush2.bf16.msra.mxu0 0
    %724 = vmatprep.subr.bf16.mxu0 0
    %725 = vmatpush2.bf16.msra.mxu0 0
    %726 = vmatprep.subr.bf16.mxu0 0
    %727 = vmatpush2.bf16.msra.mxu0 0
    %728 = vmatprep.subr.bf16.mxu0 0
    %729 = vmatpush2.bf16.msra.mxu0 0
    %730 = vmatprep.subr.bf16.mxu0 0
    %731 = vmatpush2.bf16.msra.mxu0 0
    %732 = vmatprep.subr.bf16.mxu0 0
    %733 = vmatpush2.bf16.msra.mxu0 0
    %734 = vmatprep.subr.bf16.mxu0 0
    %735 = vmatpush2.bf16.msra.mxu0 0
    %736 = vmatprep.subr.bf16.mxu0 0
    %737 = vmatpush2.bf16.msra.mxu0 0
    %738 = vmatprep.mubr.bf16.mxu0 0
    %739 = vmatmul.mubr.bf16.gmra.mxu0 %v701
    %v740 = vpop.f32.mrf.mxu0
    %v741 = vadd.f32 %v664, %v740
    %v742 = vpop.f32.mrf.mxu0
    %v743 = vpop.f32.mrf.mxu0
    %v744 = vpop.f32.mrf.mxu0
    %745 = vdwg.mxu0
    %v746 = vmax.f32 %v741, 0.0
    %v747 = vld [vmem:[#allocation4 + $0x2a0] sm:$0xf]
    %v748 = vld [vmem:[#allocation4 + $0x2a8] sm:$0xf]
    %v749 = vld [vmem:[#allocation4 + $0x2b0] sm:$0xf]
    %v750 = vld [vmem:[#allocation4 + $0x2b8] sm:$0xf]
    %v751 = vld [vmem:[#allocation4 + $0x2c0] sm:$0xf]
    %v752 = vld [vmem:[#allocation4 + $0x2c8] sm:$0x3]
    %v753 = vpack.c.bf16 %v746, %v746
    %v754 = vld [vmem:[#allocation6 + $0x5] ss:$0 sm:$0xff]
    %v761 = vunpack.c.l.b16 %v747
    %v762 = vunpack.c.l.b16 %v748
    %v763 = vunpack.c.l.b16 %v749
    %v764 = vunpack.c.l.b16 %v750
    %v765 = vunpack.c.l.b16 %v751
    %v766 = vunpack.c.l.b16 %v752
    %v767 = vpack.c.b16 %v762, %v761
    %v768 = vpack.c.b16 %v764, %v763
    %v769 = vpack.c.b16 %v766, %v765
    %vm772 = vcmask 359424
    %v774 = vsel %vm772, %v753, 0
    %v777 = vsel %vm353, %v769, 0
    %779 = vmatprep.subr.bf16.mxu0 0
    %780 = vmatpush1.bf16.msra.mxu0 0
    %781 = vmatprep.subr.bf16.mxu0 0
    %782 = vmatpush1.bf16.msra.mxu0 0
    %783 = vmatprep.subr.bf16.mxu0 0
    %784 = vmatpush1.bf16.msra.mxu0 0
    %785 = vmatprep.subr.bf16.mxu0 0
    %786 = vmatpush1.bf16.msra.mxu0 0
    %787 = vmatprep.subr.bf16.mxu0 0
    %788 = vmatpush1.bf16.msra.mxu0 0
    %789 = vmatprep.subr.bf16.mxu0 0
    %790 = vmatpush1.bf16.msra.mxu0 %v777
    %791 = vmatprep.subr.bf16.mxu0 0
    %792 = vmatpush1.bf16.msra.mxu0 %v768
    %793 = vmatprep.subr.bf16.mxu0 0
    %794 = vmatpush1.bf16.msra.mxu0 %v767
    %795 = vmatprep.subr.bf16.mxu0 0
    %796 = vmatpush2.bf16.msra.mxu0 0
    %797 = vmatprep.subr.bf16.mxu0 0
    %798 = vmatpush2.bf16.msra.mxu0 0
    %799 = vmatprep.subr.bf16.mxu0 0
    %800 = vmatpush2.bf16.msra.mxu0 0
    %801 = vmatprep.subr.bf16.mxu0 0
    %802 = vmatpush2.bf16.msra.mxu0 0
    %803 = vmatprep.subr.bf16.mxu0 0
    %804 = vmatpush2.bf16.msra.mxu0 0
    %805 = vmatprep.subr.bf16.mxu0 0
    %806 = vmatpush2.bf16.msra.mxu0 0
    %807 = vmatprep.subr.bf16.mxu0 0
    %808 = vmatpush2.bf16.msra.mxu0 0
    %809 = vmatprep.subr.bf16.mxu0 0
    %810 = vmatpush2.bf16.msra.mxu0 0
    %811 = vmatprep.mubr.bf16.mxu0 0
    %812 = vmatmul.mubr.bf16.gmra.mxu0 %v774
    %v813 = vpop.f32.mrf.mxu0
    %v814 = vadd.f32 %v754, %v813
    %v815 = vpop.f32.mrf.mxu0
    %v816 = vpop.f32.mrf.mxu0
    %v817 = vpop.f32.mrf.mxu0
    %818 = vdwg.mxu0
    %v819 = vmax.f32 %v814, 0.0
    %v820 = vld [vmem:[#allocation4 + $0x5a0] sm:$0xf]
    %v821 = vld [vmem:[#allocation4 + $0x5a8] sm:$0xf]
    %v822 = vld [vmem:[#allocation4 + $0x5b0] sm:$0x3]
    %v823 = vpack.c.bf16 %v819, %v819
    %v824 = vld [vmem:[#allocation6 + $0x22] ss:$0 sm:$0xff]
    %v828 = vunpack.c.l.b16 %v820
    %v829 = vunpack.c.l.b16 %v821
    %v830 = vunpack.c.l.b16 %v822
    %v831 = vpack.c.b16 %v829, %v828
    %v832 = vpack.c.b16 %v830, %v830
    %vm834 = vcmask 162816
    %v836 = vsel %vm834, %v823, 0
    %vm838 = vcmask 1041408
    %v840 = vsel %vm838, %v832, 0
    %842 = vmatprep.subr.bf16.mxu0 0
    %843 = vmatpush1.bf16.msra.mxu0 0
    %844 = vmatprep.subr.bf16.mxu0 0
    %845 = vmatpush1.bf16.msra.mxu0 0
    %846 = vmatprep.subr.bf16.mxu0 0
    %847 = vmatpush1.bf16.msra.mxu0 0
    %848 = vmatprep.subr.bf16.mxu0 0
    %849 = vmatpush1.bf16.msra.mxu0 0
    %850 = vmatprep.subr.bf16.mxu0 0
    %851 = vmatpush1.bf16.msra.mxu0 0
    %852 = vmatprep.subr.bf16.mxu0 0
    %853 = vmatpush1.bf16.msra.mxu0 0
    %854 = vmatprep.subr.bf16.mxu0 0
    %855 = vmatpush1.bf16.msra.mxu0 %v840
    %856 = vmatprep.subr.bf16.mxu0 0
    %857 = vmatpush1.bf16.msra.mxu0 %v831
    %858 = vmatprep.subr.bf16.mxu0 0
    %859 = vmatpush2.bf16.msra.mxu0 0
    %860 = vmatprep.subr.bf16.mxu0 0
    %861 = vmatpush2.bf16.msra.mxu0 0
    %862 = vmatprep.subr.bf16.mxu0 0
    %863 = vmatpush2.bf16.msra.mxu0 0
    %864 = vmatprep.subr.bf16.mxu0 0
    %865 = vmatpush2.bf16.msra.mxu0 0
    %866 = vmatprep.subr.bf16.mxu0 0
    %867 = vmatpush2.bf16.msra.mxu0 0
    %868 = vmatprep.subr.bf16.mxu0 0
    %869 = vmatpush2.bf16.msra.mxu0 0
    %870 = vmatprep.subr.bf16.mxu0 0
    %871 = vmatpush2.bf16.msra.mxu0 0
    %872 = vmatprep.subr.bf16.mxu0 0
    %873 = vmatpush2.bf16.msra.mxu0 0
    %874 = vmatprep.mubr.bf16.mxu0 0
    %875 = vmatmul.mubr.bf16.gmra.mxu0 %v836
    %v876 = vpop.f32.mrf.mxu0
    %v877 = vadd.f32 %v824, %v876
    %v878 = vpop.f32.mrf.mxu0
    %v879 = vpop.f32.mrf.mxu0
    %v880 = vpop.f32.mrf.mxu0
    %881 = vdwg.mxu0
    %v882 = vmax.f32 %v877, 0.0
    %v883 = vld [vmem:[#allocation4 + $0x2d0] sm:$0xf]
    %v884 = vld [vmem:[#allocation4 + $0x2d8] sm:$0xf]
    %v885 = vld [vmem:[#allocation4 + $0x2e0] sm:$0x3]
    %v886 = vpack.c.bf16 %v882, %v882
    %v887 = vld [vmem:[#allocation6 + $0x6] ss:$0 sm:$0xff]
    %v891 = vunpack.c.l.b16 %v883
    %v892 = vunpack.c.l.b16 %v884
    %v893 = vunpack.c.l.b16 %v885
    %v894 = vpack.c.b16 %v892, %v891
    %v895 = vpack.c.b16 %v893, %v893
    %v898 = vsel %vm834, %v886, 0
    %v901 = vsel %vm838, %v895, 0
    %903 = vmatprep.subr.bf16.mxu0 0
    %904 = vmatpush1.bf16.msra.mxu0 0
    %905 = vmatprep.subr.bf16.mxu0 0
    %906 = vmatpush1.bf16.msra.mxu0 0
    %907 = vmatprep.subr.bf16.mxu0 0
    %908 = vmatpush1.bf16.msra.mxu0 0
    %909 = vmatprep.subr.bf16.mxu0 0
    %910 = vmatpush1.bf16.msra.mxu0 0
    %911 = vmatprep.subr.bf16.mxu0 0
    %912 = vmatpush1.bf16.msra.mxu0 0
    %913 = vmatprep.subr.bf16.mxu0 0
    %914 = vmatpush1.bf16.msra.mxu0 0
    %915 = vmatprep.subr.bf16.mxu0 0
    %916 = vmatpush1.bf16.msra.mxu0 %v901
    %917 = vmatprep.subr.bf16.mxu0 0
    %918 = vmatpush1.bf16.msra.mxu0 %v894
    %919 = vmatprep.subr.bf16.mxu0 0
    %920 = vmatpush2.bf16.msra.mxu0 0
    %921 = vmatprep.subr.bf16.mxu0 0
    %922 = vmatpush2.bf16.msra.mxu0 0
    %923 = vmatprep.subr.bf16.mxu0 0
    %924 = vmatpush2.bf16.msra.mxu0 0
    %925 = vmatprep.subr.bf16.mxu0 0
    %926 = vmatpush2.bf16.msra.mxu0 0
    %927 = vmatprep.subr.bf16.mxu0 0
    %928 = vmatpush2.bf16.msra.mxu0 0
    %929 = vmatprep.subr.bf16.mxu0 0
    %930 = vmatpush2.bf16.msra.mxu0 0
    %931 = vmatprep.subr.bf16.mxu0 0
    %932 = vmatpush2.bf16.msra.mxu0 0
    %933 = vmatprep.subr.bf16.mxu0 0
    %934 = vmatpush2.bf16.msra.mxu0 0
    %935 = vmatprep.mubr.bf16.mxu0 0
    %936 = vmatmul.mubr.bf16.gmra.mxu0 %v898
    %v937 = vpop.f32.mrf.mxu0
    %v938 = vadd.f32 %v887, %v937
    %v939 = vpop.f32.mrf.mxu0
    %v940 = vpop.f32.mrf.mxu0
    %v941 = vpop.f32.mrf.mxu0
    %942 = vdwg.mxu0
    %v943 = vmax.f32 %v938, 0.0
    %v944 = vld [vmem:[#allocation4 + $0x2f0] sm:$0xf]
    %v945 = vld [vmem:[#allocation4 + $0x2f8] sm:$0xf]
    %v946 = vld [vmem:[#allocation4 + $0x300] sm:$0xf]
    %v947 = vld [vmem:[#allocation4 + $0x308] sm:$0xf]
    %v948 = vld [vmem:[#allocation4 + $0x310] sm:$0xf]
    %v949 = vld [vmem:[#allocation4 + $0x318] sm:$0x3]
    %v950 = vpack.c.bf16 %v943, %v943
    %v951 = vld [vmem:[#allocation6 + $0x7] ss:$0 sm:$0xff]
    %v958 = vunpack.c.l.b16 %v944
    %v959 = vunpack.c.l.b16 %v945
    %v960 = vunpack.c.l.b16 %v946
    %v961 = vunpack.c.l.b16 %v947
    %v962 = vunpack.c.l.b16 %v948
    %v963 = vunpack.c.l.b16 %v949
    %v964 = vpack.c.b16 %v959, %v958
    %v965 = vpack.c.b16 %v961, %v960
    %v966 = vpack.c.b16 %v963, %v962
    %v970 = vsel %vm772, %v950, 0
    %v973 = vsel %vm353, %v966, 0
    %975 = vmatprep.subr.bf16.mxu0 0
    %976 = vmatpush1.bf16.msra.mxu0 0
    %977 = vmatprep.subr.bf16.mxu0 0
    %978 = vmatpush1.bf16.msra.mxu0 0
    %979 = vmatprep.subr.bf16.mxu0 0
    %980 = vmatpush1.bf16.msra.mxu0 0
    %981 = vmatprep.subr.bf16.mxu0 0
    %982 = vmatpush1.bf16.msra.mxu0 0
    %983 = vmatprep.subr.bf16.mxu0 0
    %984 = vmatpush1.bf16.msra.mxu0 0
    %985 = vmatprep.subr.bf16.mxu0 0
    %986 = vmatpush1.bf16.msra.mxu0 %v973
    %987 = vmatprep.subr.bf16.mxu0 0
    %988 = vmatpush1.bf16.msra.mxu0 %v965
    %989 = vmatprep.subr.bf16.mxu0 0
    %990 = vmatpush1.bf16.msra.mxu0 %v964
    %991 = vmatprep.subr.bf16.mxu0 0
    %992 = vmatpush2.bf16.msra.mxu0 0
    %993 = vmatprep.subr.bf16.mxu0 0
    %994 = vmatpush2.bf16.msra.mxu0 0
    %995 = vmatprep.subr.bf16.mxu0 0
    %996 = vmatpush2.bf16.msra.mxu0 0
    %997 = vmatprep.subr.bf16.mxu0 0
    %998 = vmatpush2.bf16.msra.mxu0 0
    %999 = vmatprep.subr.bf16.mxu0 0
    %1000 = vmatpush2.bf16.msra.mxu0 0
    %1001 = vmatprep.subr.bf16.mxu0 0
    %1002 = vmatpush2.bf16.msra.mxu0 0
    %1003 = vmatprep.subr.bf16.mxu0 0
    %1004 = vmatpush2.bf16.msra.mxu0 0
    %1005 = vmatprep.subr.bf16.mxu0 0
    %1006 = vmatpush2.bf16.msra.mxu0 0
    %1007 = vmatprep.mubr.bf16.mxu0 0
    %1008 = vmatmul.mubr.bf16.gmra.mxu0 %v970
    %v1009 = vpop.f32.mrf.mxu0
    %v1010 = vadd.f32 %v951, %v1009
    %v1011 = vpop.f32.mrf.mxu0
    %v1012 = vpop.f32.mrf.mxu0
    %v1013 = vpop.f32.mrf.mxu0
    %1014 = vdwg.mxu0
    %v1015 = vadd.f32 %v1010, 1.0
    %v1016 = vmul.f32 %v650, %v1015
    %v1017 = vld [vmem:[#allocation4 + $0x320] sm:$0xf]
    %v1018 = vld [vmem:[#allocation4 + $0x328] sm:$0xf]
    %v1019 = vld [vmem:[#allocation4 + $0x330] sm:$0xf]
    %v1020 = vld [vmem:[#allocation4 + $0x338] sm:$0xf]
    %v1021 = vld [vmem:[#allocation4 + $0x340] sm:$0xf]
    %v1022 = vld [vmem:[#allocation4 + $0x348] sm:$0xf]
    %v1023 = vld [vmem:[#allocation4 + $0x350] sm:$0xf]
    %v1024 = vld [vmem:[#allocation4 + $0x358] sm:$0xf]
    %v1025 = vld [vmem:[#allocation4 + $0x360] sm:$0xf]
    %v1026 = vld [vmem:[#allocation4 + $0x368] sm:$0xf]
    %v1027 = vld [vmem:[#allocation4 + $0x370] sm:$0xf]
    %v1028 = vld [vmem:[#allocation4 + $0x378] sm:$0x3]
    %v1029 = vpack.c.bf16 %v1016, %v1016
    %v1030 = vld [vmem:[#allocation6 + $0x10] ss:$0 sm:$0xff]
    %v1043 = vunpack.c.l.b16 %v1017
    %v1044 = vunpack.c.l.b16 %v1018
    %v1045 = vunpack.c.l.b16 %v1019
    %v1046 = vunpack.c.l.b16 %v1020
    %v1047 = vunpack.c.l.b16 %v1021
    %v1048 = vunpack.c.l.b16 %v1022
    %v1049 = vunpack.c.l.b16 %v1023
    %v1050 = vunpack.c.l.b16 %v1024
    %v1051 = vunpack.c.l.b16 %v1025
    %v1052 = vunpack.c.l.b16 %v1026
    %v1053 = vunpack.c.l.b16 %v1027
    %v1054 = vunpack.c.l.b16 %v1028
    %v1055 = vpack.c.b16 %v1044, %v1043
    %v1056 = vpack.c.b16 %v1046, %v1045
    %v1057 = vpack.c.b16 %v1048, %v1047
    %v1058 = vpack.c.b16 %v1050, %v1049
    %v1059 = vpack.c.b16 %v1052, %v1051
    %v1060 = vpack.c.b16 %v1054, %v1053
    %v1067 = vsel %vm601, %v1029, 0
    %v1070 = vsel %vm353, %v1060, 0
    %1072 = vmatprep.subr.bf16.mxu0 0
    %1073 = vmatpush1.bf16.msra.mxu0 0
    %1074 = vmatprep.subr.bf16.mxu0 0
    %1075 = vmatpush1.bf16.msra.mxu0 0
    %1076 = vmatprep.subr.bf16.mxu0 0
    %1077 = vmatpush1.bf16.msra.mxu0 %v1070
    %1078 = vmatprep.subr.bf16.mxu0 0
    %1079 = vmatpush1.bf16.msra.mxu0 %v1059
    %1080 = vmatprep.subr.bf16.mxu0 0
    %1081 = vmatpush1.bf16.msra.mxu0 %v1058
    %1082 = vmatprep.subr.bf16.mxu0 0
    %1083 = vmatpush1.bf16.msra.mxu0 %v1057
    %1084 = vmatprep.subr.bf16.mxu0 0
    %1085 = vmatpush1.bf16.msra.mxu0 %v1056
    %1086 = vmatprep.subr.bf16.mxu0 0
    %1087 = vmatpush1.bf16.msra.mxu0 %v1055
    %1088 = vmatprep.subr.bf16.mxu0 0
    %1089 = vmatpush2.bf16.msra.mxu0 0
    %1090 = vmatprep.subr.bf16.mxu0 0
    %1091 = vmatpush2.bf16.msra.mxu0 0
    %1092 = vmatprep.subr.bf16.mxu0 0
    %1093 = vmatpush2.bf16.msra.mxu0 0
    %1094 = vmatprep.subr.bf16.mxu0 0
    %1095 = vmatpush2.bf16.msra.mxu0 0
    %1096 = vmatprep.subr.bf16.mxu0 0
    %1097 = vmatpush2.bf16.msra.mxu0 0
    %1098 = vmatprep.subr.bf16.mxu0 0
    %1099 = vmatpush2.bf16.msra.mxu0 0
    %1100 = vmatprep.subr.bf16.mxu0 0
    %1101 = vmatpush2.bf16.msra.mxu0 0
    %1102 = vmatprep.subr.bf16.mxu0 0
    %1103 = vmatpush2.bf16.msra.mxu0 0
    %1104 = vmatprep.mubr.bf16.mxu0 0
    %1105 = vmatmul.mubr.bf16.gmra.mxu0 %v1067
    %v1106 = vpop.f32.mrf.mxu0
    %v1107 = vadd.f32 %v1030, %v1106
    %v1108 = vpop.f32.mrf.mxu0
    %v1109 = vpop.f32.mrf.mxu0
    %v1110 = vpop.f32.mrf.mxu0
    %1111 = vdwg.mxu0
    %v1112 = vmul.f32 %v1107, %v1107
    %v1113 = vld [vmem:[#allocation4 + $0x380] sm:$0xf]
    %v1114 = vld [vmem:[#allocation4 + $0x388] sm:$0xf]
    %v1115 = vld [vmem:[#allocation4 + $0x390] sm:$0xf]
    %v1116 = vld [vmem:[#allocation4 + $0x398] sm:$0xf]
    %v1117 = vld [vmem:[#allocation4 + $0x3a0] sm:$0xf]
    %v1118 = vld [vmem:[#allocation4 + $0x3a8] sm:$0x3]
    %v1119 = vpack.c.bf16 %v1112, %v1112
    %v1120 = vld [vmem:[#allocation6 + $0x11] ss:$0 sm:$0xff]
    %v1127 = vunpack.c.l.b16 %v1113
    %v1128 = vunpack.c.l.b16 %v1114
    %v1129 = vunpack.c.l.b16 %v1115
    %v1130 = vunpack.c.l.b16 %v1116
    %v1131 = vunpack.c.l.b16 %v1117
    %v1132 = vunpack.c.l.b16 %v1118
    %v1133 = vpack.c.b16 %v1128, %v1127
    %v1134 = vpack.c.b16 %v1130, %v1129
    %v1135 = vpack.c.b16 %v1132, %v1131
    %v1139 = vsel %vm772, %v1119, 0
    %v1142 = vsel %vm353, %v1135, 0
    %1144 = vmatprep.subr.bf16.mxu0 0
    %1145 = vmatpush1.bf16.msra.mxu0 0
    %1146 = vmatprep.subr.bf16.mxu0 0
    %1147 = vmatpush1.bf16.msra.mxu0 0
    %1148 = vmatprep.subr.bf16.mxu0 0
    %1149 = vmatpush1.bf16.msra.mxu0 0
    %1150 = vmatprep.subr.bf16.mxu0 0
    %1151 = vmatpush1.bf16.msra.mxu0 0
    %1152 = vmatprep.subr.bf16.mxu0 0
    %1153 = vmatpush1.bf16.msra.mxu0 0
    %1154 = vmatprep.subr.bf16.mxu0 0
    %1155 = vmatpush1.bf16.msra.mxu0 %v1142
    %1156 = vmatprep.subr.bf16.mxu0 0
    %1157 = vmatpush1.bf16.msra.mxu0 %v1134
    %1158 = vmatprep.subr.bf16.mxu0 0
    %1159 = vmatpush1.bf16.msra.mxu0 %v1133
    %1160 = vmatprep.subr.bf16.mxu0 0
    %1161 = vmatpush2.bf16.msra.mxu0 0
    %1162 = vmatprep.subr.bf16.mxu0 0
    %1163 = vmatpush2.bf16.msra.mxu0 0
    %1164 = vmatprep.subr.bf16.mxu0 0
    %1165 = vmatpush2.bf16.msra.mxu0 0
    %1166 = vmatprep.subr.bf16.mxu0 0
    %1167 = vmatpush2.bf16.msra.mxu0 0
    %1168 = vmatprep.subr.bf16.mxu0 0
    %1169 = vmatpush2.bf16.msra.mxu0 0
    %1170 = vmatprep.subr.bf16.mxu0 0
    %1171 = vmatpush2.bf16.msra.mxu0 0
    %1172 = vmatprep.subr.bf16.mxu0 0
    %1173 = vmatpush2.bf16.msra.mxu0 0
    %1174 = vmatprep.subr.bf16.mxu0 0
    %1175 = vmatpush2.bf16.msra.mxu0 0
    %1176 = vmatprep.mubr.bf16.mxu0 0
    %1177 = vmatmul.mubr.bf16.gmra.mxu0 %v1139
    %v1178 = vpop.f32.mrf.mxu0
    %v1179 = vadd.f32 %v1120, %v1178
    %v1180 = vpop.f32.mrf.mxu0
    %v1181 = vpop.f32.mrf.mxu0
    %v1182 = vpop.f32.mrf.mxu0
    %1183 = vdwg.mxu0
    %v1184 = vmax.f32 %v1179, 1e-06
    %v1185 = vrsqrt.pop %v1184
    %v1186 = vmul.f32 %v1107, %v1185
    %v1187 = vld [vmem:[#allocation4 + $0x3b0] sm:$0xf]
    %v1188 = vld [vmem:[#allocation4 + $0x3b8] sm:$0xf]
    %v1189 = vld [vmem:[#allocation4 + $0x3c0] sm:$0xf]
    %v1190 = vld [vmem:[#allocation4 + $0x3c8] sm:$0xf]
    %v1191 = vld [vmem:[#allocation4 + $0x3d0] sm:$0xf]
    %v1192 = vld [vmem:[#allocation4 + $0x3d8] sm:$0x3]
    %v1193 = vpack.c.bf16 %v1186, %v1186
    %v1194 = vld [vmem:[#allocation6 + $0x12] ss:$0 sm:$0xff]
    %v1201 = vunpack.c.l.b16 %v1187
    %v1202 = vunpack.c.l.b16 %v1188
    %v1203 = vunpack.c.l.b16 %v1189
    %v1204 = vunpack.c.l.b16 %v1190
    %v1205 = vunpack.c.l.b16 %v1191
    %v1206 = vunpack.c.l.b16 %v1192
    %v1207 = vpack.c.b16 %v1202, %v1201
    %v1208 = vpack.c.b16 %v1204, %v1203
    %v1209 = vpack.c.b16 %v1206, %v1205
    %v1213 = vsel %vm772, %v1193, 0
    %v1216 = vsel %vm353, %v1209, 0
    %1218 = vmatprep.subr.bf16.mxu0 0
    %1219 = vmatpush1.bf16.msra.mxu0 0
    %1220 = vmatprep.subr.bf16.mxu0 0
    %1221 = vmatpush1.bf16.msra.mxu0 0
    %1222 = vmatprep.subr.bf16.mxu0 0
    %1223 = vmatpush1.bf16.msra.mxu0 0
    %1224 = vmatprep.subr.bf16.mxu0 0
    %1225 = vmatpush1.bf16.msra.mxu0 0
    %1226 = vmatprep.subr.bf16.mxu0 0
    %1227 = vmatpush1.bf16.msra.mxu0 0
    %1228 = vmatprep.subr.bf16.mxu0 0
    %1229 = vmatpush1.bf16.msra.mxu0 %v1216
    %1230 = vmatprep.subr.bf16.mxu0 0
    %1231 = vmatpush1.bf16.msra.mxu0 %v1208
    %1232 = vmatprep.subr.bf16.mxu0 0
    %1233 = vmatpush1.bf16.msra.mxu0 %v1207
    %1234 = vmatprep.subr.bf16.mxu0 0
    %1235 = vmatpush2.bf16.msra.mxu0 0
    %1236 = vmatprep.subr.bf16.mxu0 0
    %1237 = vmatpush2.bf16.msra.mxu0 0
    %1238 = vmatprep.subr.bf16.mxu0 0
    %1239 = vmatpush2.bf16.msra.mxu0 0
    %1240 = vmatprep.subr.bf16.mxu0 0
    %1241 = vmatpush2.bf16.msra.mxu0 0
    %1242 = vmatprep.subr.bf16.mxu0 0
    %1243 = vmatpush2.bf16.msra.mxu0 0
    %1244 = vmatprep.subr.bf16.mxu0 0
    %1245 = vmatpush2.bf16.msra.mxu0 0
    %1246 = vmatprep.subr.bf16.mxu0 0
    %1247 = vmatpush2.bf16.msra.mxu0 0
    %1248 = vmatprep.subr.bf16.mxu0 0
    %1249 = vmatpush2.bf16.msra.mxu0 0
    %1250 = vmatprep.mubr.bf16.mxu0 0
    %1251 = vmatmul.mubr.bf16.gmra.mxu0 %v1213
    %v1252 = vpop.f32.mrf.mxu0
    %v1253 = vadd.f32 %v1194, %v1252
    %v1254 = vpop.f32.mrf.mxu0
    %v1255 = vpop.f32.mrf.mxu0
    %v1256 = vpop.f32.mrf.mxu0
    %1257 = vdwg.mxu0
    %v1258 = vld [vmem:[#allocation4 + $0x3e0] sm:$0xf]
    %v1259 = vld [vmem:[#allocation4 + $0x3e8] sm:$0xf]
    %v1260 = vld [vmem:[#allocation4 + $0x3f0] sm:$0xf]
    %v1261 = vpack.c.bf16 %v1253, %v1253
    %v1262 = vld [vmem:[#allocation6 + $0x13] ss:$0 sm:$0xff]
    %v1266 = vunpack.c.l.b16 %v1258
    %v1267 = vunpack.c.l.b16 %v1259
    %v1268 = vunpack.c.l.b16 %v1260
    %v1269 = vpack.c.b16 %v1267, %v1266
    %v1270 = vpack.c.b16 %v1268, %v1268
    %vm1272 = vcmask 195584
    %v1274 = vsel %vm1272, %v1261, 0
    %vm1276 = vcmask 1043456
    %v1278 = vsel %vm1276, %v1270, 0
    %1280 = vmatprep.subr.bf16.mxu0 0
    %1281 = vmatpush1.bf16.msra.mxu0 0
    %1282 = vmatprep.subr.bf16.mxu0 0
    %1283 = vmatpush1.bf16.msra.mxu0 0
    %1284 = vmatprep.subr.bf16.mxu0 0
    %1285 = vmatpush1.bf16.msra.mxu0 0
    %1286 = vmatprep.subr.bf16.mxu0 0
    %1287 = vmatpush1.bf16.msra.mxu0 0
    %1288 = vmatprep.subr.bf16.mxu0 0
    %1289 = vmatpush1.bf16.msra.mxu0 0
    %1290 = vmatprep.subr.bf16.mxu0 0
    %1291 = vmatpush1.bf16.msra.mxu0 0
    %1292 = vmatprep.subr.bf16.mxu0 0
    %1293 = vmatpush1.bf16.msra.mxu0 %v1278
    %1294 = vmatprep.subr.bf16.mxu0 0
    %1295 = vmatpush1.bf16.msra.mxu0 %v1269
    %1296 = vmatprep.subr.bf16.mxu0 0
    %1297 = vmatpush2.bf16.msra.mxu0 0
    %1298 = vmatprep.subr.bf16.mxu0 0
    %1299 = vmatpush2.bf16.msra.mxu0 0
    %1300 = vmatprep.subr.bf16.mxu0 0
    %1301 = vmatpush2.bf16.msra.mxu0 0
    %1302 = vmatprep.subr.bf16.mxu0 0
    %1303 = vmatpush2.bf16.msra.mxu0 0
    %1304 = vmatprep.subr.bf16.mxu0 0
    %1305 = vmatpush2.bf16.msra.mxu0 0
    %1306 = vmatprep.subr.bf16.mxu0 0
    %1307 = vmatpush2.bf16.msra.mxu0 0
    %1308 = vmatprep.subr.bf16.mxu0 0
    %1309 = vmatpush2.bf16.msra.mxu0 0
    %1310 = vmatprep.subr.bf16.mxu0 0
    %1311 = vmatpush2.bf16.msra.mxu0 0
    %1312 = vmatprep.mubr.bf16.mxu0 0
    %1313 = vmatmul.mubr.bf16.gmra.mxu0 %v1274
    %v1314 = vpop.f32.mrf.mxu0
    %v1315 = vadd.f32 %v1262, %v1314
    %v1316 = vpop.f32.mrf.mxu0
    %v1317 = vpop.f32.mrf.mxu0
    %v1318 = vpop.f32.mrf.mxu0
    %1319 = vdwg.mxu0
    %v1320 = vmax.f32 %v1315, 0.0
    %v1321 = vld [vmem:[#allocation4 + $0x400] sm:$0xf]
    %v1322 = vld [vmem:[#allocation4 + $0x408] sm:$0xf]
    %v1323 = vld [vmem:[#allocation4 + $0x410] sm:$0x3]
    %v1324 = vpack.c.bf16 %v1320, %v1320
    %v1325 = vld [vmem:[#allocation6 + $0x14] ss:$0 sm:$0xff]
    %v1329 = vunpack.c.l.b16 %v1321
    %v1330 = vunpack.c.l.b16 %v1322
    %v1331 = vunpack.c.l.b16 %v1323
    %v1332 = vpack.c.b16 %v1330, %v1329
    %v1333 = vpack.c.b16 %v1331, %v1331
    %v1336 = vsel %vm834, %v1324, 0
    %v1339 = vsel %vm838, %v1333, 0
    %1341 = vmatprep.subr.bf16.mxu0 0
    %1342 = vmatpush1.bf16.msra.mxu0 0
    %1343 = vmatprep.subr.bf16.mxu0 0
    %1344 = vmatpush1.bf16.msra.mxu0 0
    %1345 = vmatprep.subr.bf16.mxu0 0
    %1346 = vmatpush1.bf16.msra.mxu0 0
    %1347 = vmatprep.subr.bf16.mxu0 0
    %1348 = vmatpush1.bf16.msra.mxu0 0
    %1349 = vmatprep.subr.bf16.mxu0 0
    %1350 = vmatpush1.bf16.msra.mxu0 0
    %1351 = vmatprep.subr.bf16.mxu0 0
    %1352 = vmatpush1.bf16.msra.mxu0 0
    %1353 = vmatprep.subr.bf16.mxu0 0
    %1354 = vmatpush1.bf16.msra.mxu0 %v1339
    %1355 = vmatprep.subr.bf16.mxu0 0
    %1356 = vmatpush1.bf16.msra.mxu0 %v1332
    %1357 = vmatprep.subr.bf16.mxu0 0
    %1358 = vmatpush2.bf16.msra.mxu0 0
    %1359 = vmatprep.subr.bf16.mxu0 0
    %1360 = vmatpush2.bf16.msra.mxu0 0
    %1361 = vmatprep.subr.bf16.mxu0 0
    %1362 = vmatpush2.bf16.msra.mxu0 0
    %1363 = vmatprep.subr.bf16.mxu0 0
    %1364 = vmatpush2.bf16.msra.mxu0 0
    %1365 = vmatprep.subr.bf16.mxu0 0
    %1366 = vmatpush2.bf16.msra.mxu0 0
    %1367 = vmatprep.subr.bf16.mxu0 0
    %1368 = vmatpush2.bf16.msra.mxu0 0
    %1369 = vmatprep.subr.bf16.mxu0 0
    %1370 = vmatpush2.bf16.msra.mxu0 0
    %1371 = vmatprep.subr.bf16.mxu0 0
    %1372 = vmatpush2.bf16.msra.mxu0 0
    %1373 = vmatprep.mubr.bf16.mxu0 0
    %1374 = vmatmul.mubr.bf16.gmra.mxu0 %v1336
    %v1375 = vpop.f32.mrf.mxu0
    %v1376 = vadd.f32 %v1325, %v1375
    %v1377 = vpop.f32.mrf.mxu0
    %v1378 = vpop.f32.mrf.mxu0
    %v1379 = vpop.f32.mrf.mxu0
    %1380 = vdwg.mxu0
    %v1381 = vmax.f32 %v1376, 0.0
    %v1382 = vld [vmem:[#allocation4 + $0x5c0] sm:$0xf]
    %v1383 = vpack.c.bf16 %v1381, %v1381
    %v1384 = vld [vmem:[#allocation6 + $0x23] ss:$0 sm:$0xff]
    %vm1385 = vcmask 64512
    %v1387 = vsel %vm1385, %v1383, 0
    %v1390 = vsel %vm1276, %v1382, 0
    %1392 = vmatprep.subr.bf16.mxu0 0
    %1393 = vmatpush1.bf16.msra.mxu0 0
    %1394 = vmatprep.subr.bf16.mxu0 0
    %1395 = vmatpush1.bf16.msra.mxu0 0
    %1396 = vmatprep.subr.bf16.mxu0 0
    %1397 = vmatpush1.bf16.msra.mxu0 0
    %1398 = vmatprep.subr.bf16.mxu0 0
    %1399 = vmatpush1.bf16.msra.mxu0 0
    %1400 = vmatprep.subr.bf16.mxu0 0
    %1401 = vmatpush1.bf16.msra.mxu0 0
    %1402 = vmatprep.subr.bf16.mxu0 0
    %1403 = vmatpush1.bf16.msra.mxu0 0
    %1404 = vmatprep.subr.bf16.mxu0 0
    %1405 = vmatpush1.bf16.msra.mxu0 0
    %1406 = vmatprep.subr.bf16.mxu0 0
    %1407 = vmatpush1.bf16.msra.mxu0 %v1390
    %1408 = vmatprep.subr.bf16.mxu0 0
    %1409 = vmatpush2.bf16.msra.mxu0 0
    %1410 = vmatprep.subr.bf16.mxu0 0
    %1411 = vmatpush2.bf16.msra.mxu0 0
    %1412 = vmatprep.subr.bf16.mxu0 0
    %1413 = vmatpush2.bf16.msra.mxu0 0
    %1414 = vmatprep.subr.bf16.mxu0 0
    %1415 = vmatpush2.bf16.msra.mxu0 0
    %1416 = vmatprep.subr.bf16.mxu0 0
    %1417 = vmatpush2.bf16.msra.mxu0 0
    %1418 = vmatprep.subr.bf16.mxu0 0
    %1419 = vmatpush2.bf16.msra.mxu0 0
    %1420 = vmatprep.subr.bf16.mxu0 0
    %1421 = vmatpush2.bf16.msra.mxu0 0
    %1422 = vmatprep.subr.bf16.mxu0 0
    %1423 = vmatpush2.bf16.msra.mxu0 0
    %1424 = vmatprep.mubr.bf16.mxu0 0
    %1425 = vmatmul.mubr.bf16.gmra.mxu0 %v1387
    %v1426 = vpop.f32.mrf.mxu0
    %v1427 = vadd.f32 %v1384, %v1426
    %v1428 = vpop.f32.mrf.mxu0
    %v1429 = vpop.f32.mrf.mxu0
    %v1430 = vpop.f32.mrf.mxu0
    %1431 = vdwg.mxu0
    %v1432 = vmax.f32 %v1427, 0.0
    %v1433 = vld [vmem:[#allocation4 + $0x420] sm:$0xf]
    %v1434 = vpack.c.bf16 %v1432, %v1432
    %v1435 = vld [vmem:[#allocation6 + $0x15] ss:$0 sm:$0xff]
    %v1437 = vsel %vm1385, %v1434, 0
    %v1440 = vsel %vm1276, %v1433, 0
    %1442 = vmatprep.subr.bf16.mxu0 0
    %1443 = vmatpush1.bf16.msra.mxu0 0
    %1444 = vmatprep.subr.bf16.mxu0 0
    %1445 = vmatpush1.bf16.msra.mxu0 0
    %1446 = vmatprep.subr.bf16.mxu0 0
    %1447 = vmatpush1.bf16.msra.mxu0 0
    %1448 = vmatprep.subr.bf16.mxu0 0
    %1449 = vmatpush1.bf16.msra.mxu0 0
    %1450 = vmatprep.subr.bf16.mxu0 0
    %1451 = vmatpush1.bf16.msra.mxu0 0
    %1452 = vmatprep.subr.bf16.mxu0 0
    %1453 = vmatpush1.bf16.msra.mxu0 0
    %1454 = vmatprep.subr.bf16.mxu0 0
    %1455 = vmatpush1.bf16.msra.mxu0 0
    %1456 = vmatprep.subr.bf16.mxu0 0
    %1457 = vmatpush1.bf16.msra.mxu0 %v1440
    %1458 = vmatprep.subr.bf16.mxu0 0
    %1459 = vmatpush2.bf16.msra.mxu0 0
    %1460 = vmatprep.subr.bf16.mxu0 0
    %1461 = vmatpush2.bf16.msra.mxu0 0
    %1462 = vmatprep.subr.bf16.mxu0 0
    %1463 = vmatpush2.bf16.msra.mxu0 0
    %1464 = vmatprep.subr.bf16.mxu0 0
    %1465 = vmatpush2.bf16.msra.mxu0 0
    %1466 = vmatprep.subr.bf16.mxu0 0
    %1467 = vmatpush2.bf16.msra.mxu0 0
    %1468 = vmatprep.subr.bf16.mxu0 0
    %1469 = vmatpush2.bf16.msra.mxu0 0
    %1470 = vmatprep.subr.bf16.mxu0 0
    %1471 = vmatpush2.bf16.msra.mxu0 0
    %1472 = vmatprep.subr.bf16.mxu0 0
    %1473 = vmatpush2.bf16.msra.mxu0 0
    %1474 = vmatprep.mubr.bf16.mxu0 0
    %1475 = vmatmul.mubr.bf16.gmra.mxu0 %v1437
    %v1476 = vpop.f32.mrf.mxu0
    %v1477 = vadd.f32 %v1435, %v1476
    %v1478 = vpop.f32.mrf.mxu0
    %v1479 = vpop.f32.mrf.mxu0
    %v1480 = vpop.f32.mrf.mxu0
    %1481 = vdwg.mxu0
    %v1482 = vmax.f32 %v1477, 0.0
    %v1483 = vld [vmem:[#allocation4 + $0x430] sm:$0xf]
    %v1484 = vld [vmem:[#allocation4 + $0x438] sm:$0xf]
    %v1485 = vld [vmem:[#allocation4 + $0x440] sm:$0x3]
    %v1486 = vpack.c.bf16 %v1482, %v1482
    %v1487 = vld [vmem:[#allocation6 + $0x16] ss:$0 sm:$0xff]
    %v1491 = vunpack.c.l.b16 %v1483
    %v1492 = vunpack.c.l.b16 %v1484
    %v1493 = vunpack.c.l.b16 %v1485
    %v1494 = vpack.c.b16 %v1492, %v1491
    %v1495 = vpack.c.b16 %v1493, %v1493
    %v1498 = vsel %vm834, %v1486, 0
    %v1501 = vsel %vm838, %v1495, 0
    %1503 = vmatprep.subr.bf16.mxu0 0
    %1504 = vmatpush1.bf16.msra.mxu0 0
    %1505 = vmatprep.subr.bf16.mxu0 0
    %1506 = vmatpush1.bf16.msra.mxu0 0
    %1507 = vmatprep.subr.bf16.mxu0 0
    %1508 = vmatpush1.bf16.msra.mxu0 0
    %1509 = vmatprep.subr.bf16.mxu0 0
    %1510 = vmatpush1.bf16.msra.mxu0 0
    %1511 = vmatprep.subr.bf16.mxu0 0
    %1512 = vmatpush1.bf16.msra.mxu0 0
    %1513 = vmatprep.subr.bf16.mxu0 0
    %1514 = vmatpush1.bf16.msra.mxu0 0
    %1515 = vmatprep.subr.bf16.mxu0 0
    %1516 = vmatpush1.bf16.msra.mxu0 %v1501
    %1517 = vmatprep.subr.bf16.mxu0 0
    %1518 = vmatpush1.bf16.msra.mxu0 %v1494
    %1519 = vmatprep.subr.bf16.mxu0 0
    %1520 = vmatpush2.bf16.msra.mxu0 0
    %1521 = vmatprep.subr.bf16.mxu0 0
    %1522 = vmatpush2.bf16.msra.mxu0 0
    %1523 = vmatprep.subr.bf16.mxu0 0
    %1524 = vmatpush2.bf16.msra.mxu0 0
    %1525 = vmatprep.subr.bf16.mxu0 0
    %1526 = vmatpush2.bf16.msra.mxu0 0
    %1527 = vmatprep.subr.bf16.mxu0 0
    %1528 = vmatpush2.bf16.msra.mxu0 0
    %1529 = vmatprep.subr.bf16.mxu0 0
    %1530 = vmatpush2.bf16.msra.mxu0 0
    %1531 = vmatprep.subr.bf16.mxu0 0
    %1532 = vmatpush2.bf16.msra.mxu0 0
    %1533 = vmatprep.subr.bf16.mxu0 0
    %1534 = vmatpush2.bf16.msra.mxu0 0
    %1535 = vmatprep.mubr.bf16.mxu0 0
    %1536 = vmatmul.mubr.bf16.gmra.mxu0 %v1498
    %v1537 = vpop.f32.mrf.mxu0
    %v1538 = vadd.f32 %v1487, %v1537
    %v1539 = vpop.f32.mrf.mxu0
    %v1540 = vpop.f32.mrf.mxu0
    %v1541 = vpop.f32.mrf.mxu0
    %1542 = vdwg.mxu0
    %v1543 = vadd.f32 %v1538, 1.0
    %v1544 = vmul.f32 %v1253, %v1543
    %v1545 = vld [vmem:[#allocation4 + $0x450] sm:$0xf]
    %v1546 = vld [vmem:[#allocation4 + $0x458] sm:$0xf]
    %v1547 = vld [vmem:[#allocation4 + $0x460] sm:$0xf]
    %v1548 = vld [vmem:[#allocation4 + $0x468] sm:$0xf]
    %v1549 = vld [vmem:[#allocation4 + $0x470] sm:$0xf]
    %v1550 = vld [vmem:[#allocation4 + $0x478] sm:$0xf]
    %v1551 = vld [vmem:[#allocation4 + $0x480] sm:$0xf]
    %v1552 = vld [vmem:[#allocation4 + $0x488] sm:$0xf]
    %v1553 = vld [vmem:[#allocation4 + $0x490] sm:$0xf]
    %v1554 = vld [vmem:[#allocation4 + $0x498] sm:$0xf]
    %v1555 = vld [vmem:[#allocation4 + $0x4a0] sm:$0xf]
    %v1556 = vld [vmem:[#allocation4 + $0x4a8] sm:$0xf]
    %v1557 = vld [vmem:[#allocation4 + $0x4b0] sm:$0xf]
    %v1558 = vld [vmem:[#allocation4 + $0x4b8] sm:$0xf]
    %v1559 = vld [vmem:[#allocation4 + $0x4c0] sm:$0xf]
    %v1560 = vld [vmem:[#allocation4 + $0x4c8] sm:$0xf]
    %v1561 = vld [vmem:[#allocation4 + $0x4d0] sm:$0xf]
    %v1562 = vld [vmem:[#allocation4 + $0x4d8] sm:$0xf]
    %v1563 = vld [vmem:[#allocation4 + $0x4e0] sm:$0xf]
    %v1564 = vld [vmem:[#allocation4 + $0x4e8] sm:$0xf]
    %v1565 = vld [vmem:[#allocation4 + $0x4f0] sm:$0xf]
    %v1566 = vld [vmem:[#allocation4 + $0x4f8] sm:$0xf]
    %v1567 = vld [vmem:[#allocation4 + $0x500] sm:$0xf]
    %v1568 = vld [vmem:[#allocation4 + $0x508] sm:$0x3]
    %v1569 = vld [vmem:[#allocation6 + $0x17] ss:$0 sm:$0xff]
    %v1594 = vunpack.c.l.b16 %v1545
    %v1595 = vunpack.c.l.b16 %v1546
    %v1596 = vunpack.c.l.b16 %v1547
    %v1597 = vunpack.c.l.b16 %v1548
    %v1598 = vunpack.c.l.b16 %v1549
    %v1599 = vunpack.c.l.b16 %v1550
    %v1600 = vunpack.c.l.b16 %v1551
    %v1601 = vunpack.c.l.b16 %v1552
    %v1602 = vunpack.c.l.b16 %v1553
    %v1603 = vunpack.c.l.b16 %v1554
    %v1604 = vunpack.c.l.b16 %v1555
    %v1605 = vunpack.c.l.b16 %v1556
    %v1606 = vunpack.c.l.b16 %v1557
    %v1607 = vunpack.c.l.b16 %v1558
    %v1608 = vunpack.c.l.b16 %v1559
    %v1609 = vunpack.c.l.b16 %v1560
    %v1610 = vunpack.c.l.b16 %v1561
    %v1611 = vunpack.c.l.b16 %v1562
    %v1612 = vunpack.c.l.b16 %v1563
    %v1613 = vunpack.c.l.b16 %v1564
    %v1614 = vunpack.c.l.b16 %v1565
    %v1615 = vunpack.c.l.b16 %v1566
    %v1616 = vunpack.c.l.b16 %v1567
    %v1617 = vunpack.c.l.b16 %v1568
    %v1618 = vpack.c.b16 %v1595, %v1594
    %v1619 = vpack.c.b16 %v1597, %v1596
    %v1620 = vpack.c.b16 %v1599, %v1598
    %v1621 = vpack.c.b16 %v1601, %v1600
    %v1622 = vpack.c.b16 %v1603, %v1602
    %v1623 = vpack.c.b16 %v1605, %v1604
    %v1624 = vpack.c.b16 %v1607, %v1606
    %v1625 = vpack.c.b16 %v1609, %v1608
    %v1626 = vpack.c.b16 %v1611, %v1610
    %v1627 = vpack.c.b16 %v1613, %v1612
    %v1628 = vpack.c.b16 %v1615, %v1614
    %v1629 = vpack.c.b16 %v1617, %v1616
    %v1642 = vsel %vm353, %v1629, 0
    %1644 = vmatprep.subr.bf16.mxu0 0
    %1645 = vmatpush1.bf16.msra.mxu0 %v1625
    %1646 = vmatprep.subr.bf16.mxu0 0
    %1647 = vmatpush1.bf16.msra.mxu0 %v1624
    %1648 = vmatprep.subr.bf16.mxu0 0
    %1649 = vmatpush1.bf16.msra.mxu0 %v1623
    %1650 = vmatprep.subr.bf16.mxu0 0
    %1651 = vmatpush1.bf16.msra.mxu0 %v1622
    %1652 = vmatprep.subr.bf16.mxu0 0
    %1653 = vmatpush1.bf16.msra.mxu0 %v1621
    %1654 = vmatprep.subr.bf16.mxu0 0
    %1655 = vmatpush1.bf16.msra.mxu0 %v1620
    %1656 = vmatprep.subr.bf16.mxu0 0
    %1657 = vmatpush1.bf16.msra.mxu0 %v1619
    %1658 = vmatprep.subr.bf16.mxu0 0
    %1659 = vmatpush1.bf16.msra.mxu0 %v1618
    %1660 = vmatprep.subr.bf16.mxu0 0
    %1661 = vmatpush2.bf16.msra.mxu0 0
    %1662 = vmatprep.subr.bf16.mxu0 0
    %1663 = vmatpush2.bf16.msra.mxu0 0
    %1664 = vmatprep.subr.bf16.mxu0 0
    %1665 = vmatpush2.bf16.msra.mxu0 0
    %1666 = vmatprep.subr.bf16.mxu0 0
    %1667 = vmatpush2.bf16.msra.mxu0 0
    %1668 = vmatprep.subr.bf16.mxu0 0
    %1669 = vmatpush2.bf16.msra.mxu0 %v1642
    %1670 = vmatprep.subr.bf16.mxu0 0
    %1671 = vmatpush2.bf16.msra.mxu0 %v1628
    %1672 = vmatprep.subr.bf16.mxu0 0
    %1673 = vmatpush2.bf16.msra.mxu0 %v1627
    %1674 = vmatprep.subr.bf16.mxu0 0
    %1675 = vmatpush2.bf16.msra.mxu0 %v1626
    %1676 = vmatprep.mubr.bf16.mxu0 %v506
    %1677 = vmatmul.mubr.bf16.gmra.mxu0 %v431
    %v1678 = vpop.f32.mrf.mxu0
    %v1679 = vadd.f32 %v1569, %v1678
    %v1680 = vpop.f32.mrf.mxu0
    %v1681 = vpop.f32.mrf.mxu0
    %v1682 = vpop.f32.mrf.mxu0
    %1683 = vdwg.mxu0
    %v1684 = vld [vmem:[#allocation4 + $0x510] sm:$0xf]
    %v1685 = vld [vmem:[#allocation4 + $0x518] sm:$0xf]
    %v1686 = vld [vmem:[#allocation4 + $0x520] sm:$0xf]
    %v1687 = vld [vmem:[#allocation4 + $0x528] sm:$0xf]
    %v1688 = vld [vmem:[#allocation4 + $0x530] sm:$0xf]
    %v1689 = vld [vmem:[#allocation4 + $0x538] sm:$0xf]
    %v1690 = vld [vmem:[#allocation4 + $0x540] sm:$0xf]
    %v1691 = vld [vmem:[#allocation4 + $0x548] sm:$0xf]
    %v1692 = vld [vmem:[#allocation4 + $0x550] sm:$0xf]
    %v1693 = vld [vmem:[#allocation4 + $0x558] sm:$0xf]
    %v1694 = vld [vmem:[#allocation4 + $0x560] sm:$0xf]
    %v1695 = vld [vmem:[#allocation4 + $0x568] sm:$0x3]
    %v1696 = vld [vmem:[#allocation6 + $0x20] ss:$0 sm:$0xff]
    %v1709 = vunpack.c.l.b16 %v1684
    %v1710 = vunpack.c.l.b16 %v1685
    %v1711 = vunpack.c.l.b16 %v1686
    %v1712 = vunpack.c.l.b16 %v1687
    %v1713 = vunpack.c.l.b16 %v1688
    %v1714 = vunpack.c.l.b16 %v1689
    %v1715 = vunpack.c.l.b16 %v1690
    %v1716 = vunpack.c.l.b16 %v1691
    %v1717 = vunpack.c.l.b16 %v1692
    %v1718 = vunpack.c.l.b16 %v1693
    %v1719 = vunpack.c.l.b16 %v1694
    %v1720 = vunpack.c.l.b16 %v1695
    %v1721 = vpack.c.b16 %v1710, %v1709
    %v1722 = vpack.c.b16 %v1712, %v1711
    %v1723 = vpack.c.b16 %v1714, %v1713
    %v1724 = vpack.c.b16 %v1716, %v1715
    %v1725 = vpack.c.b16 %v1718, %v1717
    %v1726 = vpack.c.b16 %v1720, %v1719
    %v1733 = vsel %vm353, %v1726, 0
    %1735 = vmatprep.subr.bf16.mxu0 0
    %1736 = vmatpush1.bf16.msra.mxu0 0
    %1737 = vmatprep.subr.bf16.mxu0 0
    %1738 = vmatpush1.bf16.msra.mxu0 0
    %1739 = vmatprep.subr.bf16.mxu0 0
    %1740 = vmatpush1.bf16.msra.mxu0 %v1733
    %1741 = vmatprep.subr.bf16.mxu0 0
    %1742 = vmatpush1.bf16.msra.mxu0 %v1725
    %1743 = vmatprep.subr.bf16.mxu0 0
    %1744 = vmatpush1.bf16.msra.mxu0 %v1724
    %1745 = vmatprep.subr.bf16.mxu0 0
    %1746 = vmatpush1.bf16.msra.mxu0 %v1723
    %1747 = vmatprep.subr.bf16.mxu0 0
    %1748 = vmatpush1.bf16.msra.mxu0 %v1722
    %1749 = vmatprep.subr.bf16.mxu0 0
    %1750 = vmatpush1.bf16.msra.mxu0 %v1721
    %1751 = vmatprep.subr.bf16.mxu0 0
    %1752 = vmatpush2.bf16.msra.mxu0 0
    %1753 = vmatprep.subr.bf16.mxu0 0
    %1754 = vmatpush2.bf16.msra.mxu0 0
    %1755 = vmatprep.subr.bf16.mxu0 0
    %1756 = vmatpush2.bf16.msra.mxu0 0
    %1757 = vmatprep.subr.bf16.mxu0 0
    %1758 = vmatpush2.bf16.msra.mxu0 0
    %1759 = vmatprep.subr.bf16.mxu0 0
    %1760 = vmatpush2.bf16.msra.mxu0 0
    %1761 = vmatprep.subr.bf16.mxu0 0
    %1762 = vmatpush2.bf16.msra.mxu0 0
    %1763 = vmatprep.subr.bf16.mxu0 0
    %1764 = vmatpush2.bf16.msra.mxu0 0
    %1765 = vmatprep.subr.bf16.mxu0 0
    %1766 = vmatpush2.bf16.msra.mxu0 0
    %1767 = vmatprep.mubr.bf16.mxu0 0
    %1768 = vmatmul.mubr.bf16.gmra.mxu0 %v701
    %v1769 = vpop.f32.mrf.mxu0
    %v1770 = vadd.f32 %v1696, %v1769
    %v1771 = vpop.f32.mrf.mxu0
    %v1772 = vpop.f32.mrf.mxu0
    %v1773 = vpop.f32.mrf.mxu0
    %1774 = vdwg.mxu0
    %v1775 = vld [vmem:[#allocation4 + $0x570] sm:$0xf]
    %v1776 = vld [vmem:[#allocation4 + $0x578] sm:$0xf]
    %v1777 = vld [vmem:[#allocation4 + $0x580] sm:$0xf]
    %v1778 = vld [vmem:[#allocation4 + $0x588] sm:$0xf]
    %v1779 = vld [vmem:[#allocation4 + $0x590] sm:$0xf]
    %v1780 = vld [vmem:[#allocation4 + $0x598] sm:$0x3]
    %v1781 = vld [vmem:[#allocation6 + $0x21] ss:$0 sm:$0xff]
    %v1788 = vunpack.c.l.b16 %v1775
    %v1789 = vunpack.c.l.b16 %v1776
    %v1790 = vunpack.c.l.b16 %v1777
    %v1791 = vunpack.c.l.b16 %v1778
    %v1792 = vunpack.c.l.b16 %v1779
    %v1793 = vunpack.c.l.b16 %v1780
    %v1794 = vpack.c.b16 %v1789, %v1788
    %v1795 = vpack.c.b16 %v1791, %v1790
    %v1796 = vpack.c.b16 %v1793, %v1792
    %v1800 = vsel %vm353, %v1796, 0
    %1802 = vmatprep.subr.bf16.mxu0 0
    %1803 = vmatpush1.bf16.msra.mxu0 0
    %1804 = vmatprep.subr.bf16.mxu0 0
    %1805 = vmatpush1.bf16.msra.mxu0 0
    %1806 = vmatprep.subr.bf16.mxu0 0
    %1807 = vmatpush1.bf16.msra.mxu0 0
    %1808 = vmatprep.subr.bf16.mxu0 0
    %1809 = vmatpush1.bf16.msra.mxu0 0
    %1810 = vmatprep.subr.bf16.mxu0 0
    %1811 = vmatpush1.bf16.msra.mxu0 0
    %1812 = vmatprep.subr.bf16.mxu0 0
    %1813 = vmatpush1.bf16.msra.mxu0 %v1800
    %1814 = vmatprep.subr.bf16.mxu0 0
    %1815 = vmatpush1.bf16.msra.mxu0 %v1795
    %1816 = vmatprep.subr.bf16.mxu0 0
    %1817 = vmatpush1.bf16.msra.mxu0 %v1794
    %1818 = vmatprep.subr.bf16.mxu0 0
    %1819 = vmatpush2.bf16.msra.mxu0 0
    %1820 = vmatprep.subr.bf16.mxu0 0
    %1821 = vmatpush2.bf16.msra.mxu0 0
    %1822 = vmatprep.subr.bf16.mxu0 0
    %1823 = vmatpush2.bf16.msra.mxu0 0
    %1824 = vmatprep.subr.bf16.mxu0 0
    %1825 = vmatpush2.bf16.msra.mxu0 0
    %1826 = vmatprep.subr.bf16.mxu0 0
    %1827 = vmatpush2.bf16.msra.mxu0 0
    %1828 = vmatprep.subr.bf16.mxu0 0
    %1829 = vmatpush2.bf16.msra.mxu0 0
    %1830 = vmatprep.subr.bf16.mxu0 0
    %1831 = vmatpush2.bf16.msra.mxu0 0
    %1832 = vmatprep.subr.bf16.mxu0 0
    %1833 = vmatpush2.bf16.msra.mxu0 0
    %1834 = vmatprep.mubr.bf16.mxu0 0
    %1835 = vmatmul.mubr.bf16.gmra.mxu0 %v1213
    %v1836 = vpop.f32.mrf.mxu0
    %v1837 = vadd.f32 %v1781, %v1836
    %v1838 = vpop.f32.mrf.mxu0
    %v1839 = vpop.f32.mrf.mxu0
    %v1840 = vpop.f32.mrf.mxu0
    %1841 = vdwg.mxu0
    %v1842 = vld [vmem:[#allocation4 + $0x5d0] sm:$0xf]
    %v1843 = vld [vmem:[#allocation4 + $0x5d8] sm:$0xf]
    %v1844 = vld [vmem:[#allocation4 + $0x5e0] sm:$0xf]
    %v1845 = vpack.c.bf16 %v1544, %v1544
    %v1846 = vld [vmem:[#allocation4 + $0x5f0] sm:$0xf]
    %v1847 = vld [vmem:[#allocation4 + $0x5f8] sm:$0xf]
    %v1848 = vld [vmem:[#allocation4 + $0x600] sm:$0xf]
    %v1849 = vpack.c.bf16 %v1679, %v1679
    %v1853 = vunpack.c.l.b16 %v1846
    %v1854 = vunpack.c.l.b16 %v1847
    %v1855 = vunpack.c.l.b16 %v1848
    %v1856 = vpack.c.b16 %v1854, %v1853
    %v1857 = vpack.c.b16 %v1855, %v1855
    %v1860 = vsel %vm1272, %v1849, 0
    %v1863 = vsel %vm1276, %v1857, 0
    %1865 = vmatprep.subr.bf16.mxu0 0
    %1866 = vmatpush1.bf16.msra.mxu0 0
    %1867 = vmatprep.subr.bf16.mxu0 0
    %1868 = vmatpush1.bf16.msra.mxu0 0
    %1869 = vmatprep.subr.bf16.mxu0 0
    %1870 = vmatpush1.bf16.msra.mxu0 0
    %1871 = vmatprep.subr.bf16.mxu0 0
    %1872 = vmatpush1.bf16.msra.mxu0 0
    %1873 = vmatprep.subr.bf16.mxu0 0
    %1874 = vmatpush1.bf16.msra.mxu0 0
    %1875 = vmatprep.subr.bf16.mxu0 0
    %1876 = vmatpush1.bf16.msra.mxu0 0
    %1877 = vmatprep.subr.bf16.mxu0 0
    %1878 = vmatpush1.bf16.msra.mxu0 %v1863
    %1879 = vmatprep.subr.bf16.mxu0 0
    %1880 = vmatpush1.bf16.msra.mxu0 %v1856
    %1881 = vmatprep.subr.bf16.mxu0 0
    %1882 = vmatpush2.bf16.msra.mxu0 0
    %1883 = vmatprep.subr.bf16.mxu0 0
    %1884 = vmatpush2.bf16.msra.mxu0 0
    %1885 = vmatprep.subr.bf16.mxu0 0
    %1886 = vmatpush2.bf16.msra.mxu0 0
    %1887 = vmatprep.subr.bf16.mxu0 0
    %1888 = vmatpush2.bf16.msra.mxu0 0
    %1889 = vmatprep.subr.bf16.mxu0 0
    %1890 = vmatpush2.bf16.msra.mxu0 0
    %1891 = vmatprep.subr.bf16.mxu0 0
    %1892 = vmatpush2.bf16.msra.mxu0 0
    %1893 = vmatprep.subr.bf16.mxu0 0
    %1894 = vmatpush2.bf16.msra.mxu0 0
    %1895 = vmatprep.subr.bf16.mxu0 0
    %1896 = vmatpush2.bf16.msra.mxu0 0
    %1897 = vmatprep.mubr.bf16.mxu0 0
    %1898 = vmatmul.mubr.bf16.gmra.mxu0 %v1860
    %v1899 = vpop.f32.mrf.mxu0
    %v1900 = vadd.f32 0.0, %v1899
    %v1901 = vpop.f32.mrf.mxu0
    %v1902 = vpop.f32.mrf.mxu0
    %v1903 = vpop.f32.mrf.mxu0
    %1904 = vdwg.mxu0
    %v1908 = vunpack.c.l.b16 %v1842
    %v1909 = vunpack.c.l.b16 %v1843
    %v1910 = vunpack.c.l.b16 %v1844
    %v1911 = vpack.c.b16 %v1909, %v1908
    %v1912 = vpack.c.b16 %v1910, %v1910
    %v1915 = vsel %vm1272, %v1845, 0
    %v1918 = vsel %vm1276, %v1912, 0
    %1920 = vmatprep.subr.bf16.mxu0 0
    %1921 = vmatpush1.bf16.msra.mxu0 0
    %1922 = vmatprep.subr.bf16.mxu0 0
    %1923 = vmatpush1.bf16.msra.mxu0 0
    %1924 = vmatprep.subr.bf16.mxu0 0
    %1925 = vmatpush1.bf16.msra.mxu0 0
    %1926 = vmatprep.subr.bf16.mxu0 0
    %1927 = vmatpush1.bf16.msra.mxu0 0
    %1928 = vmatprep.subr.bf16.mxu0 0
    %1929 = vmatpush1.bf16.msra.mxu0 0
    %1930 = vmatprep.subr.bf16.mxu0 0
    %1931 = vmatpush1.bf16.msra.mxu0 0
    %1932 = vmatprep.subr.bf16.mxu0 0
    %1933 = vmatpush1.bf16.msra.mxu0 %v1918
    %1934 = vmatprep.subr.bf16.mxu0 0
    %1935 = vmatpush1.bf16.msra.mxu0 %v1911
    %1936 = vmatprep.subr.bf16.mxu0 0
    %1937 = vmatpush2.bf16.msra.mxu0 0
    %1938 = vmatprep.subr.bf16.mxu0 0
    %1939 = vmatpush2.bf16.msra.mxu0 0
    %1940 = vmatprep.subr.bf16.mxu0 0
    %1941 = vmatpush2.bf16.msra.mxu0 0
    %1942 = vmatprep.subr.bf16.mxu0 0
    %1943 = vmatpush2.bf16.msra.mxu0 0
    %1944 = vmatprep.subr.bf16.mxu0 0
    %1945 = vmatpush2.bf16.msra.mxu0 0
    %1946 = vmatprep.subr.bf16.mxu0 0
    %1947 = vmatpush2.bf16.msra.mxu0 0
    %1948 = vmatprep.subr.bf16.mxu0 0
    %1949 = vmatpush2.bf16.msra.mxu0 0
    %1950 = vmatprep.subr.bf16.mxu0 0
    %1951 = vmatpush2.bf16.msra.mxu0 0
    %1952 = vmatprep.mubr.bf16.mxu0 0
    %1953 = vmatmul.mubr.bf16.gmra.mxu0 %v1915
    %v1954 = vpop.f32.mrf.mxu0
    %v1955 = vadd.f32 %v1900, %v1954
    %v1956 = vpop.f32.mrf.mxu0
    %v1957 = vpop.f32.mrf.mxu0
    %v1958 = vpop.f32.mrf.mxu0
    %1959 = vdwg.mxu0
    %v1960 = vld [vmem:[#allocation4 + $0x610] sm:$0xf]
    %v1961 = vld [vmem:[#allocation4 + $0x618] sm:$0xf]
    %v1962 = vld [vmem:[#allocation4 + $0x620] sm:$0xf]
    %v1963 = vpack.c.bf16 %v1770, %v1770
    %v1967 = vunpack.c.l.b16 %v1960
    %v1968 = vunpack.c.l.b16 %v1961
    %v1969 = vunpack.c.l.b16 %v1962
    %v1970 = vpack.c.b16 %v1968, %v1967
    %v1971 = vpack.c.b16 %v1969, %v1969
    %v1974 = vsel %vm1272, %v1963, 0
    %v1977 = vsel %vm1276, %v1971, 0
    %1979 = vmatprep.subr.bf16.mxu0 0
    %1980 = vmatpush1.bf16.msra.mxu0 0
    %1981 = vmatprep.subr.bf16.mxu0 0
    %1982 = vmatpush1.bf16.msra.mxu0 0
    %1983 = vmatprep.subr.bf16.mxu0 0
    %1984 = vmatpush1.bf16.msra.mxu0 0
    %1985 = vmatprep.subr.bf16.mxu0 0
    %1986 = vmatpush1.bf16.msra.mxu0 0
    %1987 = vmatprep.subr.bf16.mxu0 0
    %1988 = vmatpush1.bf16.msra.mxu0 0
    %1989 = vmatprep.subr.bf16.mxu0 0
    %1990 = vmatpush1.bf16.msra.mxu0 0
    %1991 = vmatprep.subr.bf16.mxu0 0
    %1992 = vmatpush1.bf16.msra.mxu0 %v1977
    %1993 = vmatprep.subr.bf16.mxu0 0
    %1994 = vmatpush1.bf16.msra.mxu0 %v1970
    %1995 = vmatprep.subr.bf16.mxu0 0
    %1996 = vmatpush2.bf16.msra.mxu0 0
    %1997 = vmatprep.subr.bf16.mxu0 0
    %1998 = vmatpush2.bf16.msra.mxu0 0
    %1999 = vmatprep.subr.bf16.mxu0 0
    %2000 = vmatpush2.bf16.msra.mxu0 0
    %2001 = vmatprep.subr.bf16.mxu0 0
    %2002 = vmatpush2.bf16.msra.mxu0 0
    %2003 = vmatprep.subr.bf16.mxu0 0
    %2004 = vmatpush2.bf16.msra.mxu0 0
    %2005 = vmatprep.subr.bf16.mxu0 0
    %2006 = vmatpush2.bf16.msra.mxu0 0
    %2007 = vmatprep.subr.bf16.mxu0 0
    %2008 = vmatpush2.bf16.msra.mxu0 0
    %2009 = vmatprep.subr.bf16.mxu0 0
    %2010 = vmatpush2.bf16.msra.mxu0 0
    %2011 = vmatprep.mubr.bf16.mxu0 0
    %2012 = vmatmul.mubr.bf16.gmra.mxu0 %v1974
    %v2013 = vpop.f32.mrf.mxu0
    %v2014 = vadd.f32 0.0, %v2013
    %v2015 = vpop.f32.mrf.mxu0
    %v2016 = vpop.f32.mrf.mxu0
    %v2017 = vpop.f32.mrf.mxu0
    %2018 = vdwg.mxu0
    %v2019 = vadd.f32 %v1955, %v2014
    %v2020 = vld [vmem:[#allocation4 + $0x630] sm:$0xf]
    %v2021 = vld [vmem:[#allocation4 + $0x638] sm:$0xf]
    %v2022 = vld [vmem:[#allocation4 + $0x640] sm:$0xf]
    %v2023 = vpack.c.bf16 %v1837, %v1837
    %v2027 = vunpack.c.l.b16 %v2020
    %v2028 = vunpack.c.l.b16 %v2021
    %v2029 = vunpack.c.l.b16 %v2022
    %v2030 = vpack.c.b16 %v2028, %v2027
    %v2031 = vpack.c.b16 %v2029, %v2029
    %v2034 = vsel %vm1272, %v2023, 0
    %v2037 = vsel %vm1276, %v2031, 0
    %2039 = vmatprep.subr.bf16.mxu0 0
    %2040 = vmatpush1.bf16.msra.mxu0 0
    %2041 = vmatprep.subr.bf16.mxu0 0
    %2042 = vmatpush1.bf16.msra.mxu0 0
    %2043 = vmatprep.subr.bf16.mxu0 0
    %2044 = vmatpush1.bf16.msra.mxu0 0
    %2045 = vmatprep.subr.bf16.mxu0 0
    %2046 = vmatpush1.bf16.msra.mxu0 0
    %2047 = vmatprep.subr.bf16.mxu0 0
    %2048 = vmatpush1.bf16.msra.mxu0 0
    %2049 = vmatprep.subr.bf16.mxu0 0
    %2050 = vmatpush1.bf16.msra.mxu0 0
    %2051 = vmatprep.subr.bf16.mxu0 0
    %2052 = vmatpush1.bf16.msra.mxu0 %v2037
    %2053 = vmatprep.subr.bf16.mxu0 0
    %2054 = vmatpush1.bf16.msra.mxu0 %v2030
    %2055 = vmatprep.subr.bf16.mxu0 0
    %2056 = vmatpush2.bf16.msra.mxu0 0
    %2057 = vmatprep.subr.bf16.mxu0 0
    %2058 = vmatpush2.bf16.msra.mxu0 0
    %2059 = vmatprep.subr.bf16.mxu0 0
    %2060 = vmatpush2.bf16.msra.mxu0 0
    %2061 = vmatprep.subr.bf16.mxu0 0
    %2062 = vmatpush2.bf16.msra.mxu0 0
    %2063 = vmatprep.subr.bf16.mxu0 0
    %2064 = vmatpush2.bf16.msra.mxu0 0
    %2065 = vmatprep.subr.bf16.mxu0 0
    %2066 = vmatpush2.bf16.msra.mxu0 0
    %2067 = vmatprep.subr.bf16.mxu0 0
    %2068 = vmatpush2.bf16.msra.mxu0 0
    %2069 = vmatprep.subr.bf16.mxu0 0
    %2070 = vmatpush2.bf16.msra.mxu0 0
    %2071 = vmatprep.mubr.bf16.mxu0 0
    %2072 = vmatmul.mubr.bf16.gmra.mxu0 %v2034
    %v2073 = vpop.f32.mrf.mxu0
    %v2074 = vadd.f32 0.0, %v2073
    %v2075 = vpop.f32.mrf.mxu0
    %v2076 = vpop.f32.mrf.mxu0
    %v2077 = vpop.f32.mrf.mxu0
    %2078 = vdwg.mxu0
    %v2079 = vadd.f32 %v2019, %v2074
    %v2080 = vld [vmem:[#allocation6 + $0x24] ss:$0 sm:$0xff]
    %v2081 = vadd.f32 %v2079, %v2080
    %2082 = vst [vmem:[%s3] sm:$0xff] %v2081
    // Predicated region
    $region26: #{forward.1} parent=1 // pred_check
      _
    $region27: #{forward.1} parent=1 // pred_check_branch
      %2084 = sbr.rel (0) target = $region29
    $region28: #{forward.1} parent=1 // pred_region
      _
    $region29: #{forward.1} parent=1 // pred_fallthru
      _
    // Predicated region
    $region30: #{forward.1} parent=1 // pred_check
      _
    $region31: #{forward.1} parent=1 // pred_check_branch
      %2086 = sbr.rel (0) target = $region33
    $region32: #{forward.1} parent=1 // pred_region
      _
    $region33: #{forward.1} parent=1 // pred_fallthru
      _
    %2087 = vsyncpa [#allocation3], 1
    %2088 = vsyncpa [#allocation5], 1

</llo_original>
